<compile_context>
chip_gen: v7x
topology: tpu7x:2x2x1
jax: 0.10.0
libtpu: 0.0.40
codegen_flags: <defaults>
</compile_context>

<pallas_src>
import functools

import jax
import jax.numpy as jnp
from jax.experimental import pallas as pl
from jax.experimental.pallas import tpu as pltpu

LANE = 128  # TPU lane width / MXU-friendly tile edge


def _round_up(x, m):
    return (x + m - 1) // m * m


def _vmem_budget_bytes():
    """Usable VMEM budget for this TPU generation (with headroom for compiler scratch)."""
    try:
        cap = pltpu.get_tpu_info().vmem_capacity_bytes
    except Exception:
        cap = 64 * 1024 * 1024  # conservative fallback: v7x physical VMEM
    return int(cap) * 7 // 8


# ----------------------------------------------------------------------------------
# Kernels
# ----------------------------------------------------------------------------------
def _gnn_fused_kernel(x_ref, a_ref, w1_ref, w2_ref, b_ref, o_ref, *, num_layers):
    """All GIN layers fused; x and A stay resident in VMEM across layers.

    x_ref : [Np, P]      padded node features (matmul dtype)
    a_ref : [Np, Np]     padded dense adjacency, A[i, j] = multiplicity of edge j -> i
    w1_ref: [L, P, P]    stacked, zero-padded first MLP weights (matmul dtype)
    w2_ref: [L, P, P]    stacked, zero-padded second MLP weights (matmul dtype)
    b_ref : [L, 8, P]    packed f32 biases: row 0 = b1, row 1 = b2, rest zero
    o_ref : [Np, P]      padded f32 output features
    """
    mm_dtype = a_ref.dtype
    a = a_ref[...]
    x = x_ref[...].astype(jnp.float32)
    for l in range(num_layers):  # static unroll: L known at trace time
        # Sum aggregation over incoming edges as a dense matmul on the MXU.
        agg = jnp.dot(a, x.astype(mm_dtype), preferred_element_type=jnp.float32)
        z = x + agg  # (1 + eps) * x + agg, eps = 0  (f32 elementwise)
        bl = b_ref[l]  # (8, P) f32; row 0 = b1, row 1 = b2
        h = jnp.dot(z.astype(mm_dtype), w1_ref[l],
                    preferred_element_type=jnp.float32) + bl[0:1, :]
        h = jnp.maximum(h, 0.0)  # ReLU inside the MLP
        y = jnp.dot(h.astype(mm_dtype), w2_ref[l],
                    preferred_element_type=jnp.float32) + bl[1:2, :]
        x = jnp.maximum(y, 0.0)  # ReLU applied by GNN.forward after each layer
    o_ref[...] = x


def _gin_layer_rowtiled_kernel(a_ref, xr_ref, x_ref, w1_ref, w2_ref, b_ref, o_ref):
    """One GIN layer, node-row-tiled: A is streamed as (TM, Np) slabs, x is resident.

    a_ref : [TM, Np]   row slab of adjacency (streamed, double-buffered by Pallas)
    xr_ref: [TM, P]    row slab of node features (self term)
    x_ref : [Np, P]    full node features (VMEM resident)
    w1_ref: [P, P], w2_ref: [P, P], b_ref: [8, P] (f32; rows 0/1 = b1/b2)
    o_ref : [TM, P]
    """
    mm_dtype = x_ref.dtype
    agg = jnp.dot(a_ref[...], x_ref[...], preferred_element_type=jnp.float32)
    z = xr_ref[...].astype(jnp.float32) + agg                      # f32 elementwise
    h = jnp.dot(z.astype(mm_dtype), w1_ref[...],
                preferred_element_type=jnp.float32) + b_ref[0:1, :]
    h = jnp.maximum(h, 0.0)
    y = jnp.dot(h.astype(mm_dtype), w2_ref[...],
                preferred_element_type=jnp.float32) + b_ref[1:2, :]
    o_ref[...] = jnp.maximum(y, 0.0).astype(o_ref.dtype)


# ----------------------------------------------------------------------------------
# VMEM footprint estimates / tiling choice
# ----------------------------------------------------------------------------------
def _fused_vmem_bytes(np_, p, num_layers, mm_itemsize):
    x = np_ * p * mm_itemsize
    a = np_ * np_ * mm_itemsize
    w = 2 * num_layers * p * p * mm_itemsize
    b = num_layers * 8 * p * 4
    out = np_ * p * 4
    temps = 6 * np_ * p * 4  # f32 intermediates inside the kernel
    return x + a + w + b + out + temps


def _rowtiled_vmem_bytes(tm, np_, p, mm_itemsize):
    buf = 2  # default double-buffered pipeline
    a_slab = buf * tm * np_ * mm_itemsize
    x_slab = buf * tm * p * mm_itemsize
    x_full = buf * np_ * p * mm_itemsize
    w = buf * 2 * p * p * mm_itemsize
    b = buf * 8 * p * 4
    out = buf * tm * p * mm_itemsize
    temps = 6 * tm * p * 4
    return a_slab + x_slab + x_full + w + b + out + temps


def _choose_tm(np_, p, mm_itemsize, budget):
    """Largest row-tile (multiple of 128 dividing Np) whose footprint fits the budget."""
    for tm in (2048, 1024, 512, 256, 128):
        if tm <= np_ and np_ % tm == 0 and _rowtiled_vmem_bytes(tm, np_, p, mm_itemsize) <= budget:
            return tm
    return 128


# ----------------------------------------------------------------------------------
# pallas_call wrappers
# ----------------------------------------------------------------------------------
def _gnn_apply_fused(x_pad, a_pad, w1s, w2s, bs, vmem_limit):
    np_, p = x_pad.shape
    num_layers = w1s.shape[0]
    kernel = functools.partial(_gnn_fused_kernel, num_layers=num_layers)
    # Grid-less call: whole arrays live once in VMEM (no pointless double buffering).
    vmem_spec = pl.BlockSpec(memory_space=pltpu.MemorySpace.VMEM)
    return pl.pallas_call(
        kernel,
        out_shape=jax.ShapeDtypeStruct((np_, p), jnp.float32),
        in_specs=[vmem_spec] * 5,
        out_specs=vmem_spec,
        compiler_params=pltpu.CompilerParams(vmem_limit_bytes=vmem_limit),
    )(x_pad, a_pad, w1s, w2s, bs)


def _gin_layer_rowtiled(x_pad, a_pad, w1, w2, b, tm, vmem_limit):
    np_, p = x_pad.shape
    grid = (np_ // tm,)
    return pl.pallas_call(
        _gin_layer_rowtiled_kernel,
        out_shape=jax.ShapeDtypeStruct((np_, p), x_pad.dtype),
        grid=grid,
        in_specs=[
            pl.BlockSpec((tm, np_), lambda i: (i, 0)),   # A row slab (streamed)
            pl.BlockSpec((tm, p), lambda i: (i, 0)),     # x row slab (self term)
            pl.BlockSpec((np_, p), lambda i: (0, 0)),    # x full (resident)
            pl.BlockSpec((p, p), lambda i: (0, 0)),      # W1 (resident)
            pl.BlockSpec((p, p), lambda i: (0, 0)),      # W2 (resident)
            pl.BlockSpec((8, p), lambda i: (0, 0)),      # packed biases (resident)
        ],
        out_specs=pl.BlockSpec((tm, p), lambda i: (i, 0)),
        compiler_params=pltpu.CompilerParams(
            # Row blocks are independent -> v7x shards them across its 2 TensorCores.
            dimension_semantics=("parallel",),
            vmem_limit_bytes=vmem_limit,
        ),
    )(a_pad, x_pad, x_pad, w1, w2, b)


# ----------------------------------------------------------------------------------
# Host-side prep (hoisted: run once per graph / model) + forward
# ----------------------------------------------------------------------------------
def pack_gnn_inputs(node_features, edge_index, params, matmul_dtype=jnp.bfloat16):
    """Pad/pack node features, adjacency and all layer weights (once per graph/model)."""
    n, f_in = node_features.shape
    num_layers = len(params)
    out_dim = params[-1][2].shape[1]

    dims = [f_in] + [w1.shape[0] for (w1, _, _, _) in params] + [out_dim]
    p = _round_up(max(dims), LANE)
    np_ = _round_up(max(n, 8), LANE)

    x_pad = jnp.zeros((np_, p), matmul_dtype).at[:n, :f_in].set(
        node_features.astype(matmul_dtype))

    # Dense padded adjacency: A[dst, src] += 1 so A @ x sums x_j over incoming edges.
    # TODO(synk): for large sparse graphs (E << N^2) replace this dense O(N^2) adjacency
    # with a scalar-prefetch CSR gather / segment-sum aggregation kernel.
    src, dst = edge_index[0], edge_index[1]
    a_pad = (jnp.zeros((np_, np_), jnp.float32)
             .at[dst, src].add(1.0)).astype(matmul_dtype)

    w1s = jnp.zeros((num_layers, p, p), matmul_dtype)
    w2s = jnp.zeros((num_layers, p, p), matmul_dtype)
    bs = jnp.zeros((num_layers, 8, p), jnp.float32)
    for l, (w1, b1, w2, b2) in enumerate(params):
        d_in, d_out = w1.shape[0], w2.shape[1]
        w1s = w1s.at[l, :d_in, :d_in].set(w1.astype(matmul_dtype))
        w2s = w2s.at[l, :d_in, :d_out].set(w2.astype(matmul_dtype))
        bs = bs.at[l, 0, :d_in].set(b1[0])
        bs = bs.at[l, 1, :d_out].set(b2[0])

    meta = dict(n=n, out_dim=out_dim, np_=np_, p=p)
    return x_pad, a_pad, w1s, w2s, bs, meta


def gnn_apply_pallas(x_pad, a_pad, w1s, w2s, bs, n, out_dim, *, force_rowtiled=False):
    """Run all GIN layers on pre-packed inputs, choosing fused vs row-tiled by footprint."""
    np_, p = x_pad.shape
    num_layers = w1s.shape[0]
    mm_itemsize = jnp.dtype(x_pad.dtype).itemsize
    budget = _vmem_budget_bytes()

    use_fused = (not force_rowtiled) and (
        _fused_vmem_bytes(np_, p, num_layers, mm_itemsize) <= budget // 2)

    if use_fused:
        out_pad = _gnn_apply_fused(x_pad, a_pad, w1s, w2s, bs, budget)
    else:
        tm = _choose_tm(np_, p, mm_itemsize, budget)
        x = x_pad
        for l in range(num_layers):
            x = _gin_layer_rowtiled(x, a_pad, w1s[l], w2s[l], bs[l], tm, budget)
        out_pad = x.astype(jnp.float32)

    return out_pad[:n, :out_dim]


def gnn_forward_pallas(node_features, edge_index, params,
                       matmul_dtype=jnp.bfloat16, force_rowtiled=False):
    """Convenience wrapper: pack (once) + apply.  For repeated calls on the same graph,
    call pack_gnn_inputs once and reuse its outputs with gnn_apply_pallas."""
    x_pad, a_pad, w1s, w2s, bs, meta = pack_gnn_inputs(
        node_features, edge_index, params, matmul_dtype)
    return gnn_apply_pallas(x_pad, a_pad, w1s, w2s, bs, meta["n"], meta["out_dim"],
                            force_rowtiled=force_rowtiled)


# ----------------------------------------------------------------------------------
# Parameter init + pure-JAX references
# ----------------------------------------------------------------------------------
def init_gin_params(key, input_dim, layers):
    """Deterministic PyTorch-Linear-style init for each GIN layer's 2-layer MLP."""
    params = []
    dims = [input_dim] + list(layers)
    for i in range(len(layers)):
        d_in, d_out = dims[i], dims[i + 1]
        key, k1, k2, k3, k4 = jax.random.split(key, 5)
        bound1 = 1.0 / jnp.sqrt(d_in)
        w1 = jax.random.uniform(k1, (d_in, d_in), jnp.float32, -bound1, bound1)
        b1 = jax.random.uniform(k2, (1, d_in), jnp.float32, -bound1, bound1)
        bound2 = 1.0 / jnp.sqrt(d_in)
        w2 = jax.random.uniform(k3, (d_in, d_out), jnp.float32, -bound2, bound2)
        b2 = jax.random.uniform(k4, (1, d_out), jnp.float32, -bound2, bound2)
        params.append((w1, b1, w2, b2))
    return params


def gnn_forward_ref(node_features, adj, params):
    """Pure-JAX f32 reference (true module semantics)."""
    x = node_features
    for (w1, b1, w2, b2) in params:
        z = x + adj @ x
        h = jnp.maximum(z @ w1 + b1, 0.0)
        y = h @ w2 + b2
        x = jnp.maximum(y, 0.0)
    return x


def gnn_forward_ref_mixed(node_features, adj, params, matmul_dtype):
    """Pure-JAX reference mimicking the kernel's mixed precision (bf16 MXU operands,
    f32 accumulation / elementwise)."""
    c = lambda t: t.astype(matmul_dtype)
    x = node_features.astype(jnp.float32)
    for (w1, b1, w2, b2) in params:
        agg = jnp.dot(c(adj), c(x), preferred_element_type=jnp.float32)
        z = x + agg
        h = jnp.maximum(jnp.dot(c(z), c(w1), preferred_element_type=jnp.float32) + b1, 0.0)
        y = jnp.dot(c(h), c(w2), preferred_element_type=jnp.float32) + b2
        x = jnp.maximum(y, 0.0)
    return x


def _dense_adj(edge_index, n):
    return jnp.zeros((n, n), jnp.float32).at[edge_index[1], edge_index[0]].add(1.0)


if __name__ == "__main__":
    key = jax.random.PRNGKey(0)

    # GNN(input_dim=16, channel_dim=4, layers=[32, 32], conv_type='gin')
    input_dim = 16
    channel_dim = 4
    layers = [32, 32]
    num_nodes = 16
    num_edges = 48

    k_feat, k_edge, k_attr, k_par, k_feat2, k_edge2 = jax.random.split(key, 6)
    node_features = jax.random.normal(k_feat, (num_nodes, input_dim), jnp.float32)
    edge_index = jax.random.randint(k_edge, (2, num_edges), 0, num_nodes, jnp.int32)
    # edge_attr is unused by GINConv (interface parity with the PyTorch module).
    edge_attr = jax.random.normal(k_attr, (num_edges, channel_dim), jnp.float32)

    params = init_gin_params(k_par, input_dim, layers)
    adj = _dense_adj(edge_index, num_nodes)

    # --- small graph: all-layers-fused path ---
    # (1) f32 matmul operands -> exact check against true module semantics.
    out_f32 = gnn_forward_pallas(node_features, edge_index, params,
                                 matmul_dtype=jnp.float32)
    out_f32 = jax.block_until_ready(out_f32)
    ref_f32 = gnn_forward_ref(node_features, adj, params)
    assert out_f32.shape == (num_nodes, layers[-1]), out_f32.shape
    assert jnp.allclose(out_f32, ref_f32, atol=1e-4, rtol=1e-4), "f32 fused mismatch"

    # (2) bf16 MXU operands (default fast path) -> check against mixed-precision ref.
    out_bf16 = gnn_forward_pallas(node_features, edge_index, params,
                                  matmul_dtype=jnp.bfloat16)
    out_bf16 = jax.block_until_ready(out_bf16)
    ref_bf16 = gnn_forward_ref_mixed(node_features, adj, params, jnp.bfloat16)
    assert jnp.allclose(out_bf16, ref_bf16, atol=5e-2, rtol=2e-2), "bf16 fused mismatch"

    # --- larger graph: per-layer row-tiled/streamed-adjacency path (forced) ---
    n2, e2 = 300, 1500
    nf2 = jax.random.normal(k_feat2, (n2, input_dim), jnp.float32)
    ei2 = jax.random.randint(k_edge2, (2, e2), 0, n2, jnp.int32)
    out2 = gnn_forward_pallas(nf2, ei2, params, matmul_dtype=jnp.bfloat16,
                              force_rowtiled=True)
    out2 = jax.block_until_ready(out2)
    ref2 = gnn_forward_ref_mixed(nf2, _dense_adj(ei2, n2), params, jnp.bfloat16)
    assert out2.shape == (n2, layers[-1]), out2.shape
    assert jnp.allclose(out2, ref2, atol=5e-2, rtol=2e-2), "bf16 row-tiled mismatch"

    print("KERNEL_OK")
</pallas_src>

<mosaic_0001>
module attributes {stable_mosaic.version = 11 : i64} {
  func.func @_gnn_fused_kernel(%arg0: memref<128x128xf32, #tpu.memory_space<vmem>>, %arg1: memref<128x128xf32, #tpu.memory_space<vmem>>, %arg2: memref<2x128x128xf32, #tpu.memory_space<vmem>>, %arg3: memref<2x128x128xf32, #tpu.memory_space<vmem>>, %arg4: memref<2x8x128xf32, #tpu.memory_space<vmem>>, %arg5: memref<128x128xf32, #tpu.memory_space<vmem>>) attributes {dimension_semantics = [], scalar_prefetch = 0 : i64, scratch_operands = 0 : i64, tpu.core_type = #tpu.core_type<tc>} {
    %c0 = arith.constant 0 : index
    %c0_0 = arith.constant 0 : index
    %0 = vector.load %arg1[%c0, %c0_0] : memref<128x128xf32, #tpu.memory_space<vmem>>, vector<128x128xf32>
    %c0_1 = arith.constant 0 : index
    %c0_2 = arith.constant 0 : index
    %1 = vector.load %arg0[%c0_1, %c0_2] : memref<128x128xf32, #tpu.memory_space<vmem>>, vector<128x128xf32>
    %cst = arith.constant dense<0.000000e+00> : vector<128x128xf32>
    %2 = tpu.matmul %0, %1, %cst {dimension_numbers = #tpu.dot_dimension_numbers<[1], [0], [0], [1], [0, 0, 1, 1], [], []>} : vector<128x128xf32>, vector<128x128xf32>, vector<128x128xf32> -> vector<128x128xf32>
    %3 = arith.addf %1, %2 : vector<128x128xf32>
    %c0_3 = arith.constant 0 : index
    %c0_4 = arith.constant 0 : index
    %c0_5 = arith.constant 0 : index
    %4 = vector.load %arg4[%c0_3, %c0_4, %c0_5] : memref<2x8x128xf32, #tpu.memory_space<vmem>>, vector<1x8x128xf32>
    %5 = vector.shape_cast %4 : vector<1x8x128xf32> to vector<8x128xf32>
    %c0_6 = arith.constant 0 : index
    %c0_7 = arith.constant 0 : index
    %c0_8 = arith.constant 0 : index
    %6 = vector.load %arg2[%c0_6, %c0_7, %c0_8] : memref<2x128x128xf32, #tpu.memory_space<vmem>>, vector<1x128x128xf32>
    %7 = vector.shape_cast %6 : vector<1x128x128xf32> to vector<128x128xf32>
    %cst_9 = arith.constant dense<0.000000e+00> : vector<128x128xf32>
    %8 = tpu.matmul %3, %7, %cst_9 {dimension_numbers = #tpu.dot_dimension_numbers<[1], [0], [0], [1], [0, 0, 1, 1], [], []>} : vector<128x128xf32>, vector<128x128xf32>, vector<128x128xf32> -> vector<128x128xf32>
    %9 = vector.extract_strided_slice %5 {offsets = [0, 0], sizes = [1, 128], strides = [1, 1]} : vector<8x128xf32> to vector<1x128xf32>
    %10 = vector.broadcast %9 : vector<1x128xf32> to vector<128x128xf32>
    %11 = arith.addf %8, %10 : vector<128x128xf32>
    %cst_10 = arith.constant 0.000000e+00 : f32
    %12 = vector.broadcast %cst_10 : f32 to vector<128x128xf32>
    %13 = arith.maximumf %11, %12 : vector<128x128xf32>
    %c0_11 = arith.constant 0 : index
    %c0_12 = arith.constant 0 : index
    %c0_13 = arith.constant 0 : index
    %14 = vector.load %arg3[%c0_11, %c0_12, %c0_13] : memref<2x128x128xf32, #tpu.memory_space<vmem>>, vector<1x128x128xf32>
    %15 = vector.shape_cast %14 : vector<1x128x128xf32> to vector<128x128xf32>
    %cst_14 = arith.constant dense<0.000000e+00> : vector<128x128xf32>
    %16 = tpu.matmul %13, %15, %cst_14 {dimension_numbers = #tpu.dot_dimension_numbers<[1], [0], [0], [1], [0, 0, 1, 1], [], []>} : vector<128x128xf32>, vector<128x128xf32>, vector<128x128xf32> -> vector<128x128xf32>
    %17 = vector.extract_strided_slice %5 {offsets = [1, 0], sizes = [1, 128], strides = [1, 1]} : vector<8x128xf32> to vector<1x128xf32>
    %18 = vector.broadcast %17 : vector<1x128xf32> to vector<128x128xf32>
    %19 = arith.addf %16, %18 : vector<128x128xf32>
    %cst_15 = arith.constant 0.000000e+00 : f32
    %20 = vector.broadcast %cst_15 : f32 to vector<128x128xf32>
    %21 = arith.maximumf %19, %20 : vector<128x128xf32>
    %cst_16 = arith.constant dense<0.000000e+00> : vector<128x128xf32>
    %22 = tpu.matmul %0, %21, %cst_16 {dimension_numbers = #tpu.dot_dimension_numbers<[1], [0], [0], [1], [0, 0, 1, 1], [], []>} : vector<128x128xf32>, vector<128x128xf32>, vector<128x128xf32> -> vector<128x128xf32>
    %23 = arith.addf %21, %22 : vector<128x128xf32>
    %c1 = arith.constant 1 : index
    %c0_17 = arith.constant 0 : index
    %c0_18 = arith.constant 0 : index
    %24 = vector.load %arg4[%c1, %c0_17, %c0_18] : memref<2x8x128xf32, #tpu.memory_space<vmem>>, vector<1x8x128xf32>
    %25 = vector.shape_cast %24 : vector<1x8x128xf32> to vector<8x128xf32>
    %c1_19 = arith.constant 1 : index
    %c0_20 = arith.constant 0 : index
    %c0_21 = arith.constant 0 : index
    %26 = vector.load %arg2[%c1_19, %c0_20, %c0_21] : memref<2x128x128xf32, #tpu.memory_space<vmem>>, vector<1x128x128xf32>
    %27 = vector.shape_cast %26 : vector<1x128x128xf32> to vector<128x128xf32>
    %cst_22 = arith.constant dense<0.000000e+00> : vector<128x128xf32>
    %28 = tpu.matmul %23, %27, %cst_22 {dimension_numbers = #tpu.dot_dimension_numbers<[1], [0], [0], [1], [0, 0, 1, 1], [], []>} : vector<128x128xf32>, vector<128x128xf32>, vector<128x128xf32> -> vector<128x128xf32>
    %29 = vector.extract_strided_slice %25 {offsets = [0, 0], sizes = [1, 128], strides = [1, 1]} : vector<8x128xf32> to vector<1x128xf32>
    %30 = vector.broadcast %29 : vector<1x128xf32> to vector<128x128xf32>
    %31 = arith.addf %28, %30 : vector<128x128xf32>
    %cst_23 = arith.constant 0.000000e+00 : f32
    %32 = vector.broadcast %cst_23 : f32 to vector<128x128xf32>
    %33 = arith.maximumf %31, %32 : vector<128x128xf32>
    %c1_24 = arith.constant 1 : index
    %c0_25 = arith.constant 0 : index
    %c0_26 = arith.constant 0 : index
    %34 = vector.load %arg3[%c1_24, %c0_25, %c0_26] : memref<2x128x128xf32, #tpu.memory_space<vmem>>, vector<1x128x128xf32>
    %35 = vector.shape_cast %34 : vector<1x128x128xf32> to vector<128x128xf32>
    %cst_27 = arith.constant dense<0.000000e+00> : vector<128x128xf32>
    %36 = tpu.matmul %33, %35, %cst_27 {dimension_numbers = #tpu.dot_dimension_numbers<[1], [0], [0], [1], [0, 0, 1, 1], [], []>} : vector<128x128xf32>, vector<128x128xf32>, vector<128x128xf32> -> vector<128x128xf32>
    %37 = vector.extract_strided_slice %25 {offsets = [1, 0], sizes = [1, 128], strides = [1, 1]} : vector<8x128xf32> to vector<1x128xf32>
    %38 = vector.broadcast %37 : vector<1x128xf32> to vector<128x128xf32>
    %39 = arith.addf %36, %38 : vector<128x128xf32>
    %cst_28 = arith.constant 0.000000e+00 : f32
    %40 = vector.broadcast %cst_28 : f32 to vector<128x128xf32>
    %41 = arith.maximumf %39, %40 : vector<128x128xf32>
    %c0_29 = arith.constant 0 : index
    %c0_30 = arith.constant 0 : index
    %42 = vector.load %arg5[%c0_29, %c0_30] : memref<128x128xf32, #tpu.memory_space<vmem>>, vector<128x128xf32>
    tpu.vector_store %arg5[%c0_29, %c0_30], %41 {strides = array<i32>} : memref<128x128xf32, #tpu.memory_space<vmem>>, vector<128x128xf32>,
    return
  }
}

</mosaic_0001>

<llo_original>
// kernel: tpu_custom_call.1
$region0: #{tpu_custom_call.1}
  #allocation0 [shape = 'u32[]', space=smem, size = 0x4, offset = 0x4, fixed_abs, tag = 'smem constant byte address 0x4 - core index']
  #allocation1 [shape = 'u32[144,128]{1,0:T(1,128)}', space=vmem, size = 0x12000, scoped, tag = 'internal scratch']
  %s0 = inlined_call_operand.hbm [shape: f32[128,128], index: 0, kind: input, shape index: {}]
  %s1 = inlined_call_operand.hbm [shape: f32[128,128], index: 1, kind: input, shape index: {}]
  %s2 = inlined_call_operand.hbm [shape: f32[2,128,128], index: 2, kind: input, shape index: {}]
  %s3 = inlined_call_operand.hbm [shape: f32[2,128,128], index: 3, kind: input, shape index: {}]
  %s4 = inlined_call_operand.hbm [shape: f32[2,8,128], index: 4, kind: input, shape index: {}]
  %s5 = inlined_call_operand.hbm [shape: f32[128,128], index: 5, kind: output, shape index: {}]
  %s6 = sld [smem:[#allocation0]]
  $region50: #{tpu_custom_call.1} parent=0
    _
  %s8 = ssub.s32 1, %s6
  %s9 = scalar_select 0, %s8, %s6
  $region1: #{tpu_custom_call.1} parent=0
    #allocation2 [shape = 'u8[65536]{0}', space=vmem, size = 0x10000, scoped, tag = 'input window, operand 0, single buffered']
    #allocation3 [shape = 's32[1]{0}', space=sflag, size = 0x4, scoped, tag = 'scoped memory for tpu_custom_call.1']
    #allocation4 [shape = 's32[1]{0}', space=sflag, size = 0x4, scoped, tag = 'scoped memory for tpu_custom_call.1']
    #allocation5 [shape = 'u8[65536]{0}', space=vmem, size = 0x10000, scoped, tag = 'input window, operand 1, single buffered']
    #allocation6 [shape = 's32[1]{0}', space=sflag, size = 0x4, scoped, tag = 'scoped memory for tpu_custom_call.1']
    #allocation7 [shape = 'u8[131072]{0}', space=vmem, size = 0x20000, scoped, tag = 'input window, operand 2, single buffered']
    #allocation8 [shape = 'u8[131072]{0}', space=vmem, size = 0x20000, scoped, tag = 'input window, operand 3, single buffered']
    #allocation9 [shape = 's32[1]{0}', space=sflag, size = 0x4, scoped, tag = 'scoped memory for tpu_custom_call.1']
    #allocation10 [shape = 'u8[8192]{0}', space=vmem, size = 0x2000, scoped, tag = 'input window, operand 4, single buffered']
    #allocation11 [shape = 'u8[65536]{0}', space=vmem, size = 0x10000, scoped, tag = 'output window, operand 0, single buffered']
    %10 = vsyncpa [#allocation3], 0
    %11 = vsyncpa [#allocation6], 0
    %12 = vsyncpa [#allocation9], 0
    %13 = vsyncpa [#allocation4], 0
    // Predicated region
    $region2: #{tpu_custom_call.1} parent=1 // pred_check
      _
    $region3: #{tpu_custom_call.1} parent=1 // pred_check_branch
      %15 = sbr.rel (0) target = $region5
    $region4: #{tpu_custom_call.1} parent=1 // pred_region
      %s17 = ssub.s32 2048, 2048
      %18 = vsyncadd [#allocation3], %s17
      %s19 = sshll.u32 [#allocation2], 4
      %s20 = int_to_ptr.vmem [resolvable:$true] %s19
      %25 = dma.hbm_to_vmem [thread:$0]  %s0, 2048, %s20, [#allocation3], 128, 128, 8
    $region5: #{tpu_custom_call.1} parent=1 // pred_fallthru
      _
    // Predicated region
    $region6: #{tpu_custom_call.1} parent=1 // pred_check
      _
    $region7: #{tpu_custom_call.1} parent=1 // pred_check_branch
      %27 = sbr.rel (0) target = $region9
    $region8: #{tpu_custom_call.1} parent=1 // pred_region
      %s29 = ssub.s32 2048, 2048
      %30 = vsyncadd [#allocation6], %s29
      %s31 = sshll.u32 [#allocation5], 4
      %s32 = int_to_ptr.vmem [resolvable:$true] %s31
      %37 = dma.hbm_to_vmem [thread:$0]  %s1, 2048, %s32, [#allocation6], 128, 128, 8
    $region9: #{tpu_custom_call.1} parent=1 // pred_fallthru
      _
    // Predicated region
    $region10: #{tpu_custom_call.1} parent=1 // pred_check
      _
    $region11: #{tpu_custom_call.1} parent=1 // pred_check_branch
      %39 = sbr.rel (0) target = $region13
    $region12: #{tpu_custom_call.1} parent=1 // pred_region
      %s41 = ssub.s32 4096, 4096
      %42 = vsyncadd [#allocation6], %s41
      %s43 = sshll.u32 [#allocation7], 4
      %s44 = int_to_ptr.vmem [resolvable:$true] %s43
      %49 = dma.hbm_to_vmem [thread:$0]  %s2, 4096, %s44, [#allocation6], 128, 128, 8
    $region13: #{tpu_custom_call.1} parent=1 // pred_fallthru
      _
    // Predicated region
    $region14: #{tpu_custom_call.1} parent=1 // pred_check
      _
    $region15: #{tpu_custom_call.1} parent=1 // pred_check_branch
      %51 = sbr.rel (0) target = $region17
    $region16: #{tpu_custom_call.1} parent=1 // pred_region
      %s53 = ssub.s32 4096, 4096
      %54 = vsyncadd [#allocation9], %s53
      %s55 = sshll.u32 [#allocation8], 4
      %s56 = int_to_ptr.vmem [resolvable:$true] %s55
      %61 = dma.hbm_to_vmem [thread:$0]  %s3, 4096, %s56, [#allocation9], 128, 128, 8
    $region17: #{tpu_custom_call.1} parent=1 // pred_fallthru
      _
    // Predicated region
    $region18: #{tpu_custom_call.1} parent=1 // pred_check
      _
    $region19: #{tpu_custom_call.1} parent=1 // pred_check_branch
      %63 = sbr.rel (0) target = $region21
    $region20: #{tpu_custom_call.1} parent=1 // pred_region
      %s65 = ssub.s32 256, 256
      %66 = vsyncadd [#allocation9], %s65
      %s67 = sshll.u32 [#allocation10], 4
      %s68 = int_to_ptr.vmem [resolvable:$true] %s67
      %73 = dma.hbm_to_vmem [thread:$0]  %s4, 256, %s68, [#allocation9], 128, 128, 8
    $region21: #{tpu_custom_call.1} parent=1 // pred_fallthru
      _
    // Predicated region
    $region22: #{tpu_custom_call.1} parent=1 // pred_check
      _
    $region23: #{tpu_custom_call.1} parent=1 // pred_check_branch
      %75 = sbr.rel (0) target = $region25
    $region24: #{tpu_custom_call.1} parent=1 // pred_region
      %76 = dma.done [#allocation3], 2048
    $region25: #{tpu_custom_call.1} parent=1 // pred_fallthru
      _
    // Predicated region
    $region26: #{tpu_custom_call.1} parent=1 // pred_check
      _
    $region27: #{tpu_custom_call.1} parent=1 // pred_check_branch
      %78 = sbr.rel (0) target = $region29
    $region28: #{tpu_custom_call.1} parent=1 // pred_region
      %79 = dma.done [#allocation6], 2048
    $region29: #{tpu_custom_call.1} parent=1 // pred_fallthru
      _
    // Predicated region
    $region30: #{tpu_custom_call.1} parent=1 // pred_check
      _
    $region31: #{tpu_custom_call.1} parent=1 // pred_check_branch
      %81 = sbr.rel (0) target = $region33
    $region32: #{tpu_custom_call.1} parent=1 // pred_region
      %82 = dma.done [#allocation6], 4096
    $region33: #{tpu_custom_call.1} parent=1 // pred_fallthru
      _
    // Predicated region
    $region34: #{tpu_custom_call.1} parent=1 // pred_check
      _
    $region35: #{tpu_custom_call.1} parent=1 // pred_check_branch
      %84 = sbr.rel (0) target = $region37
    $region36: #{tpu_custom_call.1} parent=1 // pred_region
      %85 = dma.done [#allocation9], 4096
    $region37: #{tpu_custom_call.1} parent=1 // pred_fallthru
      _
    // Predicated region
    $region38: #{tpu_custom_call.1} parent=1 // pred_check
      _
    $region39: #{tpu_custom_call.1} parent=1 // pred_check_branch
      %87 = sbr.rel (0) target = $region41
    $region40: #{tpu_custom_call.1} parent=1 // pred_region
      %88 = dma.done [#allocation9], 256
    $region41: #{tpu_custom_call.1} parent=1 // pred_fallthru
      _
    %v89 = vld [vmem:[#allocation5] sm:$0xff]
    %v90 = vld [vmem:[#allocation5 + $0x8] sm:$0xff]
    %v91 = vld [vmem:[#allocation5 + $0x10] sm:$0xff]
    %v92 = vld [vmem:[#allocation5 + $0x18] sm:$0xff]
    %v93 = vld [vmem:[#allocation5 + $0x20] sm:$0xff]
    %v94 = vld [vmem:[#allocation5 + $0x28] sm:$0xff]
    %v95 = vld [vmem:[#allocation5 + $0x30] sm:$0xff]
    %v96 = vld [vmem:[#allocation5 + $0x38] sm:$0xff]
    %v97 = vld [vmem:[#allocation5 + $0x40] sm:$0xff]
    %v98 = vld [vmem:[#allocation5 + $0x48] sm:$0xff]
    %v99 = vld [vmem:[#allocation5 + $0x50] sm:$0xff]
    %v100 = vld [vmem:[#allocation5 + $0x58] sm:$0xff]
    %v101 = vld [vmem:[#allocation5 + $0x60] sm:$0xff]
    %v102 = vld [vmem:[#allocation5 + $0x68] sm:$0xff]
    %v103 = vld [vmem:[#allocation5 + $0x70] sm:$0xff]
    %v104 = vld [vmem:[#allocation5 + $0x78] sm:$0xff]
    %v105 = vld [vmem:[#allocation2] sm:$0xff]
    %v106 = vld [vmem:[#allocation2 + $0x8] sm:$0xff]
    %v107 = vld [vmem:[#allocation2 + $0x10] sm:$0xff]
    %v108 = vld [vmem:[#allocation2 + $0x18] sm:$0xff]
    %v109 = vld [vmem:[#allocation2 + $0x20] sm:$0xff]
    %v110 = vld [vmem:[#allocation2 + $0x28] sm:$0xff]
    %v111 = vld [vmem:[#allocation2 + $0x30] sm:$0xff]
    %v112 = vld [vmem:[#allocation2 + $0x38] sm:$0xff]
    %v113 = vld [vmem:[#allocation2 + $0x40] sm:$0xff]
    %v114 = vld [vmem:[#allocation2 + $0x48] sm:$0xff]
    %v115 = vld [vmem:[#allocation2 + $0x50] sm:$0xff]
    %v116 = vld [vmem:[#allocation2 + $0x58] sm:$0xff]
    %v117 = vld [vmem:[#allocation2 + $0x60] sm:$0xff]
    %v118 = vld [vmem:[#allocation2 + $0x68] sm:$0xff]
    %v119 = vld [vmem:[#allocation2 + $0x70] sm:$0xff]
    %v120 = vld [vmem:[#allocation2 + $0x78] sm:$0xff]
    %121 = vmatprep.subr.mxu0 0.0
    %122 = vmatpush1.msra.mxu0 %v105
    %123 = vmatprep.subr.mxu0 0.0
    %124 = vmatpush1.msra.mxu0 %v106
    %125 = vmatprep.subr.mxu0 0.0
    %126 = vmatpush1.msra.mxu0 %v107
    %127 = vmatprep.subr.mxu0 0.0
    %128 = vmatpush1.msra.mxu0 %v108
    %129 = vmatprep.subr.mxu0 0.0
    %130 = vmatpush1.msra.mxu0 %v109
    %131 = vmatprep.subr.mxu0 0.0
    %132 = vmatpush1.msra.mxu0 %v110
    %133 = vmatprep.subr.mxu0 0.0
    %134 = vmatpush1.msra.mxu0 %v111
    %135 = vmatprep.subr.mxu0 0.0
    %136 = vmatpush1.msra.mxu0 %v112
    %137 = vmatprep.subr.mxu0 0.0
    %138 = vmatpush1.msra.mxu0 %v113
    %139 = vmatprep.subr.mxu0 0.0
    %140 = vmatpush1.msra.mxu0 %v114
    %141 = vmatprep.subr.mxu0 0.0
    %142 = vmatpush1.msra.mxu0 %v115
    %143 = vmatprep.subr.mxu0 0.0
    %144 = vmatpush1.msra.mxu0 %v116
    %145 = vmatprep.subr.mxu0 0.0
    %146 = vmatpush1.msra.mxu0 %v117
    %147 = vmatprep.subr.mxu0 0.0
    %148 = vmatpush1.msra.mxu0 %v118
    %149 = vmatprep.subr.mxu0 0.0
    %150 = vmatpush1.msra.mxu0 %v119
    %151 = vmatprep.subr.mxu0 0.0
    %152 = vmatpush1.msra.mxu0 %v120
    %153 = vmatprep.subr.mxu0 0.0
    %154 = vmatpush1.msra.mxu0 0.0
    %155 = vmatprep.subr.mxu0 0.0
    %156 = vmatpush1.msra.mxu0 0.0
    %157 = vmatprep.subr.mxu0 0.0
    %158 = vmatpush1.msra.mxu0 0.0
    %159 = vmatprep.subr.mxu0 0.0
    %160 = vmatpush1.msra.mxu0 0.0
    %161 = vmatprep.subr.mxu0 0.0
    %162 = vmatpush1.msra.mxu0 0.0
    %163 = vmatprep.subr.mxu0 0.0
    %164 = vmatpush1.msra.mxu0 0.0
    %165 = vmatprep.subr.mxu0 0.0
    %166 = vmatpush1.msra.mxu0 0.0
    %167 = vmatprep.subr.mxu0 0.0
    %168 = vmatpush1.msra.mxu0 0.0
    %169 = vmatprep.subr.mxu0 0.0
    %170 = vmatpush1.msra.mxu0 0.0
    %171 = vmatprep.subr.mxu0 0.0
    %172 = vmatpush1.msra.mxu0 0.0
    %173 = vmatprep.subr.mxu0 0.0
    %174 = vmatpush1.msra.mxu0 0.0
    %175 = vmatprep.subr.mxu0 0.0
    %176 = vmatpush1.msra.mxu0 0.0
    %177 = vmatprep.subr.mxu0 0.0
    %178 = vmatpush1.msra.mxu0 0.0
    %179 = vmatprep.subr.mxu0 0.0
    %180 = vmatpush1.msra.mxu0 0.0
    %181 = vmatprep.subr.mxu0 0.0
    %182 = vmatpush1.msra.mxu0 0.0
    %183 = vmatprep.subr.mxu0 0.0
    %184 = vmatpush1.msra.mxu0 0.0
    %185 = vmatprep.mubr.f32.mxu0 0.0
    %186 = vmatmul.mubr.f32.gmra.mrb[0].mxu0 %v89
    %v187 = vpop.f32.mrb[0].mxu0
    %v188 = vadd.f32 0.0, %v187
    %v189 = vpop.f32.mrb[0].mxu0
    %190 = vmatprep.mubr.f32.mxu0 0.0
    %191 = vmatmul.mubr.f32.gmra.mrb[0].mxu0 %v90
    %v192 = vpop.f32.mrb[0].mxu0
    %v193 = vadd.f32 0.0, %v192
    %v194 = vpop.f32.mrb[0].mxu0
    %195 = vmatprep.mubr.f32.mxu0 0.0
    %196 = vmatmul.mubr.f32.gmra.mrb[0].mxu0 %v91
    %v197 = vpop.f32.mrb[0].mxu0
    %v198 = vadd.f32 0.0, %v197
    %v199 = vpop.f32.mrb[0].mxu0
    %200 = vmatprep.mubr.f32.mxu0 0.0
    %201 = vmatmul.mubr.f32.gmra.mrb[0].mxu0 %v92
    %v202 = vpop.f32.mrb[0].mxu0
    %v203 = vadd.f32 0.0, %v202
    %v204 = vpop.f32.mrb[0].mxu0
    %205 = vmatprep.mubr.f32.mxu0 0.0
    %206 = vmatmul.mubr.f32.gmra.mrb[0].mxu0 %v93
    %v207 = vpop.f32.mrb[0].mxu0
    %v208 = vadd.f32 0.0, %v207
    %v209 = vpop.f32.mrb[0].mxu0
    %210 = vmatprep.mubr.f32.mxu0 0.0
    %211 = vmatmul.mubr.f32.gmra.mrb[0].mxu0 %v94
    %v212 = vpop.f32.mrb[0].mxu0
    %v213 = vadd.f32 0.0, %v212
    %v214 = vpop.f32.mrb[0].mxu0
    %215 = vmatprep.mubr.f32.mxu0 0.0
    %216 = vmatmul.mubr.f32.gmra.mrb[0].mxu0 %v95
    %v217 = vpop.f32.mrb[0].mxu0
    %v218 = vadd.f32 0.0, %v217
    %v219 = vpop.f32.mrb[0].mxu0
    %220 = vmatprep.mubr.f32.mxu0 0.0
    %221 = vmatmul.mubr.f32.gmra.mrb[0].mxu0 %v96
    %v222 = vpop.f32.mrb[0].mxu0
    %v223 = vadd.f32 0.0, %v222
    %v224 = vpop.f32.mrb[0].mxu0
    %225 = vmatprep.mubr.f32.mxu0 0.0
    %226 = vmatmul.mubr.f32.gmra.mrb[0].mxu0 %v97
    %v227 = vpop.f32.mrb[0].mxu0
    %v228 = vadd.f32 0.0, %v227
    %v229 = vpop.f32.mrb[0].mxu0
    %230 = vmatprep.mubr.f32.mxu0 0.0
    %231 = vmatmul.mubr.f32.gmra.mrb[0].mxu0 %v98
    %v232 = vpop.f32.mrb[0].mxu0
    %v233 = vadd.f32 0.0, %v232
    %v234 = vpop.f32.mrb[0].mxu0
    %235 = vmatprep.mubr.f32.mxu0 0.0
    %236 = vmatmul.mubr.f32.gmra.mrb[0].mxu0 %v99
    %v237 = vpop.f32.mrb[0].mxu0
    %v238 = vadd.f32 0.0, %v237
    %v239 = vpop.f32.mrb[0].mxu0
    %240 = vmatprep.mubr.f32.mxu0 0.0
    %241 = vmatmul.mubr.f32.gmra.mrb[0].mxu0 %v100
    %v242 = vpop.f32.mrb[0].mxu0
    %v243 = vadd.f32 0.0, %v242
    %v244 = vpop.f32.mrb[0].mxu0
    %245 = vmatprep.mubr.f32.mxu0 0.0
    %246 = vmatmul.mubr.f32.gmra.mrb[0].mxu0 %v101
    %v247 = vpop.f32.mrb[0].mxu0
    %v248 = vadd.f32 0.0, %v247
    %v249 = vpop.f32.mrb[0].mxu0
    %250 = vmatprep.mubr.f32.mxu0 0.0
    %251 = vmatmul.mubr.f32.gmra.mrb[0].mxu0 %v102
    %v252 = vpop.f32.mrb[0].mxu0
    %v253 = vadd.f32 0.0, %v252
    %v254 = vpop.f32.mrb[0].mxu0
    %255 = vmatprep.mubr.f32.mxu0 0.0
    %256 = vmatmul.mubr.f32.gmra.mrb[0].mxu0 %v103
    %v257 = vpop.f32.mrb[0].mxu0
    %v258 = vadd.f32 0.0, %v257
    %v259 = vpop.f32.mrb[0].mxu0
    %260 = vmatprep.mubr.f32.mxu0 0.0
    %261 = vmatmul.mubr.f32.gmra.mrb[0].mxu0 %v104
    %v262 = vpop.f32.mrb[0].mxu0
    %v263 = vadd.f32 0.0, %v262
    %v264 = vpop.f32.mrb[0].mxu0
    %265 = vdwg.mxu0
    %v266 = vadd.f32 %v105, %v188
    %v267 = vadd.f32 %v106, %v193
    %v268 = vadd.f32 %v107, %v198
    %v269 = vadd.f32 %v108, %v203
    %v270 = vadd.f32 %v109, %v208
    %v271 = vadd.f32 %v110, %v213
    %v272 = vadd.f32 %v111, %v218
    %v273 = vadd.f32 %v112, %v223
    %v274 = vadd.f32 %v113, %v228
    %v275 = vadd.f32 %v114, %v233
    %v276 = vadd.f32 %v115, %v238
    %v277 = vadd.f32 %v116, %v243
    %v278 = vadd.f32 %v117, %v248
    %v279 = vadd.f32 %v118, %v253
    %v280 = vadd.f32 %v119, %v258
    %v281 = vadd.f32 %v120, %v263
    %v282 = vld [vmem:[#allocation10] sm:$0xff]
    %v283 = vld [vmem:[#allocation7] sm:$0xff]
    %v284 = vld [vmem:[#allocation7 + $0x8] sm:$0xff]
    %v285 = vld [vmem:[#allocation7 + $0x10] sm:$0xff]
    %v286 = vld [vmem:[#allocation7 + $0x18] sm:$0xff]
    %v287 = vld [vmem:[#allocation7 + $0x20] sm:$0xff]
    %v288 = vld [vmem:[#allocation7 + $0x28] sm:$0xff]
    %v289 = vld [vmem:[#allocation7 + $0x30] sm:$0xff]
    %v290 = vld [vmem:[#allocation7 + $0x38] sm:$0xff]
    %v291 = vld [vmem:[#allocation7 + $0x40] sm:$0xff]
    %v292 = vld [vmem:[#allocation7 + $0x48] sm:$0xff]
    %v293 = vld [vmem:[#allocation7 + $0x50] sm:$0xff]
    %v294 = vld [vmem:[#allocation7 + $0x58] sm:$0xff]
    %v295 = vld [vmem:[#allocation7 + $0x60] sm:$0xff]
    %v296 = vld [vmem:[#allocation7 + $0x68] sm:$0xff]
    %v297 = vld [vmem:[#allocation7 + $0x70] sm:$0xff]
    %v298 = vld [vmem:[#allocation7 + $0x78] sm:$0xff]
    %v299 = vlaneseq
    %v300 = vshrl.u32 %v299, 7
    %v301 = vsub.s32 0, %v300
    %v302 = vrot.slane %v282, %v301
    %303 = vmatprep.subr.mxu0 0.0
    %304 = vmatpush1.msra.mxu0 %v283
    %305 = vmatprep.subr.mxu0 0.0
    %306 = vmatpush1.msra.mxu0 %v284
    %307 = vmatprep.subr.mxu0 0.0
    %308 = vmatpush1.msra.mxu0 %v285
    %309 = vmatprep.subr.mxu0 0.0
    %310 = vmatpush1.msra.mxu0 %v286
    %311 = vmatprep.subr.mxu0 0.0
    %312 = vmatpush1.msra.mxu0 %v287
    %313 = vmatprep.subr.mxu0 0.0
    %314 = vmatpush1.msra.mxu0 %v288
    %315 = vmatprep.subr.mxu0 0.0
    %316 = vmatpush1.msra.mxu0 %v289
    %317 = vmatprep.subr.mxu0 0.0
    %318 = vmatpush1.msra.mxu0 %v290
    %319 = vmatprep.subr.mxu0 0.0
    %320 = vmatpush1.msra.mxu0 %v291
    %321 = vmatprep.subr.mxu0 0.0
    %322 = vmatpush1.msra.mxu0 %v292
    %323 = vmatprep.subr.mxu0 0.0
    %324 = vmatpush1.msra.mxu0 %v293
    %325 = vmatprep.subr.mxu0 0.0
    %326 = vmatpush1.msra.mxu0 %v294
    %327 = vmatprep.subr.mxu0 0.0
    %328 = vmatpush1.msra.mxu0 %v295
    %329 = vmatprep.subr.mxu0 0.0
    %330 = vmatpush1.msra.mxu0 %v296
    %331 = vmatprep.subr.mxu0 0.0
    %332 = vmatpush1.msra.mxu0 %v297
    %333 = vmatprep.subr.mxu0 0.0
    %334 = vmatpush1.msra.mxu0 %v298
    %335 = vmatprep.subr.mxu0 0.0
    %336 = vmatpush1.msra.mxu0 0.0
    %337 = vmatprep.subr.mxu0 0.0
    %338 = vmatpush1.msra.mxu0 0.0
    %339 = vmatprep.subr.mxu0 0.0
    %340 = vmatpush1.msra.mxu0 0.0
    %341 = vmatprep.subr.mxu0 0.0
    %342 = vmatpush1.msra.mxu0 0.0
    %343 = vmatprep.subr.mxu0 0.0
    %344 = vmatpush1.msra.mxu0 0.0
    %345 = vmatprep.subr.mxu0 0.0
    %346 = vmatpush1.msra.mxu0 0.0
    %347 = vmatprep.subr.mxu0 0.0
    %348 = vmatpush1.msra.mxu0 0.0
    %349 = vmatprep.subr.mxu0 0.0
    %350 = vmatpush1.msra.mxu0 0.0
    %351 = vmatprep.subr.mxu0 0.0
    %352 = vmatpush1.msra.mxu0 0.0
    %353 = vmatprep.subr.mxu0 0.0
    %354 = vmatpush1.msra.mxu0 0.0
    %355 = vmatprep.subr.mxu0 0.0
    %356 = vmatpush1.msra.mxu0 0.0
    %357 = vmatprep.subr.mxu0 0.0
    %358 = vmatpush1.msra.mxu0 0.0
    %359 = vmatprep.subr.mxu0 0.0
    %360 = vmatpush1.msra.mxu0 0.0
    %361 = vmatprep.subr.mxu0 0.0
    %362 = vmatpush1.msra.mxu0 0.0
    %363 = vmatprep.subr.mxu0 0.0
    %364 = vmatpush1.msra.mxu0 0.0
    %365 = vmatprep.subr.mxu0 0.0
    %366 = vmatpush1.msra.mxu0 0.0
    %367 = vmatprep.mubr.f32.mxu0 0.0
    %368 = vmatmul.mubr.f32.gmra.mrb[0].mxu0 %v266
    %v369 = vpop.f32.mrb[0].mxu0
    %v370 = vadd.f32 %v302, %v369
    %v371 = vpop.f32.mrb[0].mxu0
    %372 = vmatprep.mubr.f32.mxu0 0.0
    %373 = vmatmul.mubr.f32.gmra.mrb[0].mxu0 %v267
    %v374 = vpop.f32.mrb[0].mxu0
    %v375 = vadd.f32 %v302, %v374
    %v376 = vpop.f32.mrb[0].mxu0
    %377 = vmatprep.mubr.f32.mxu0 0.0
    %378 = vmatmul.mubr.f32.gmra.mrb[0].mxu0 %v268
    %v379 = vpop.f32.mrb[0].mxu0
    %v380 = vadd.f32 %v302, %v379
    %v381 = vpop.f32.mrb[0].mxu0
    %382 = vmatprep.mubr.f32.mxu0 0.0
    %383 = vmatmul.mubr.f32.gmra.mrb[0].mxu0 %v269
    %v384 = vpop.f32.mrb[0].mxu0
    %v385 = vadd.f32 %v302, %v384
    %v386 = vpop.f32.mrb[0].mxu0
    %387 = vmatprep.mubr.f32.mxu0 0.0
    %388 = vmatmul.mubr.f32.gmra.mrb[0].mxu0 %v270
    %v389 = vpop.f32.mrb[0].mxu0
    %v390 = vadd.f32 %v302, %v389
    %v391 = vpop.f32.mrb[0].mxu0
    %392 = vmatprep.mubr.f32.mxu0 0.0
    %393 = vmatmul.mubr.f32.gmra.mrb[0].mxu0 %v271
    %v394 = vpop.f32.mrb[0].mxu0
    %v395 = vadd.f32 %v302, %v394
    %v396 = vpop.f32.mrb[0].mxu0
    %397 = vmatprep.mubr.f32.mxu0 0.0
    %398 = vmatmul.mubr.f32.gmra.mrb[0].mxu0 %v272
    %v399 = vpop.f32.mrb[0].mxu0
    %v400 = vadd.f32 %v302, %v399
    %v401 = vpop.f32.mrb[0].mxu0
    %402 = vmatprep.mubr.f32.mxu0 0.0
    %403 = vmatmul.mubr.f32.gmra.mrb[0].mxu0 %v273
    %v404 = vpop.f32.mrb[0].mxu0
    %v405 = vadd.f32 %v302, %v404
    %v406 = vpop.f32.mrb[0].mxu0
    %407 = vmatprep.mubr.f32.mxu0 0.0
    %408 = vmatmul.mubr.f32.gmra.mrb[0].mxu0 %v274
    %v409 = vpop.f32.mrb[0].mxu0
    %v410 = vadd.f32 %v302, %v409
    %v411 = vpop.f32.mrb[0].mxu0
    %412 = vmatprep.mubr.f32.mxu0 0.0
    %413 = vmatmul.mubr.f32.gmra.mrb[0].mxu0 %v275
    %v414 = vpop.f32.mrb[0].mxu0
    %v415 = vadd.f32 %v302, %v414
    %v416 = vpop.f32.mrb[0].mxu0
    %417 = vmatprep.mubr.f32.mxu0 0.0
    %418 = vmatmul.mubr.f32.gmra.mrb[0].mxu0 %v276
    %v419 = vpop.f32.mrb[0].mxu0
    %v420 = vadd.f32 %v302, %v419
    %v421 = vpop.f32.mrb[0].mxu0
    %422 = vmatprep.mubr.f32.mxu0 0.0
    %423 = vmatmul.mubr.f32.gmra.mrb[0].mxu0 %v277
    %v424 = vpop.f32.mrb[0].mxu0
    %v425 = vadd.f32 %v302, %v424
    %v426 = vpop.f32.mrb[0].mxu0
    %427 = vmatprep.mubr.f32.mxu0 0.0
    %428 = vmatmul.mubr.f32.gmra.mrb[0].mxu0 %v278
    %v429 = vpop.f32.mrb[0].mxu0
    %v430 = vadd.f32 %v302, %v429
    %v431 = vpop.f32.mrb[0].mxu0
    %432 = vmatprep.mubr.f32.mxu0 0.0
    %433 = vmatmul.mubr.f32.gmra.mrb[0].mxu0 %v279
    %v434 = vpop.f32.mrb[0].mxu0
    %v435 = vadd.f32 %v302, %v434
    %v436 = vpop.f32.mrb[0].mxu0
    %437 = vmatprep.mubr.f32.mxu0 0.0
    %438 = vmatmul.mubr.f32.gmra.mrb[0].mxu0 %v280
    %v439 = vpop.f32.mrb[0].mxu0
    %v440 = vadd.f32 %v302, %v439
    %v441 = vpop.f32.mrb[0].mxu0
    %442 = vmatprep.mubr.f32.mxu0 0.0
    %443 = vmatmul.mubr.f32.gmra.mrb[0].mxu0 %v281
    %v444 = vpop.f32.mrb[0].mxu0
    %v445 = vadd.f32 %v302, %v444
    %v446 = vpop.f32.mrb[0].mxu0
    %447 = vdwg.mxu0
    %v448 = vmax.f32 %v370, 0.0
    %v449 = vmax.f32 %v375, 0.0
    %v450 = vmax.f32 %v380, 0.0
    %v451 = vmax.f32 %v385, 0.0
    %v452 = vmax.f32 %v390, 0.0
    %v453 = vmax.f32 %v395, 0.0
    %v454 = vmax.f32 %v400, 0.0
    %v455 = vmax.f32 %v405, 0.0
    %v456 = vmax.f32 %v410, 0.0
    %v457 = vmax.f32 %v415, 0.0
    %v458 = vmax.f32 %v420, 0.0
    %v459 = vmax.f32 %v425, 0.0
    %v460 = vmax.f32 %v430, 0.0
    %v461 = vmax.f32 %v435, 0.0
    %v462 = vmax.f32 %v440, 0.0
    %v463 = vmax.f32 %v445, 0.0
    %v464 = vld [vmem:[#allocation8] sm:$0xff]
    %v465 = vld [vmem:[#allocation8 + $0x8] sm:$0xff]
    %v466 = vld [vmem:[#allocation8 + $0x10] sm:$0xff]
    %v467 = vld [vmem:[#allocation8 + $0x18] sm:$0xff]
    %v468 = vld [vmem:[#allocation8 + $0x20] sm:$0xff]
    %v469 = vld [vmem:[#allocation8 + $0x28] sm:$0xff]
    %v470 = vld [vmem:[#allocation8 + $0x30] sm:$0xff]
    %v471 = vld [vmem:[#allocation8 + $0x38] sm:$0xff]
    %v472 = vld [vmem:[#allocation8 + $0x40] sm:$0xff]
    %v473 = vld [vmem:[#allocation8 + $0x48] sm:$0xff]
    %v474 = vld [vmem:[#allocation8 + $0x50] sm:$0xff]
    %v475 = vld [vmem:[#allocation8 + $0x58] sm:$0xff]
    %v476 = vld [vmem:[#allocation8 + $0x60] sm:$0xff]
    %v477 = vld [vmem:[#allocation8 + $0x68] sm:$0xff]
    %v478 = vld [vmem:[#allocation8 + $0x70] sm:$0xff]
    %v479 = vld [vmem:[#allocation8 + $0x78] sm:$0xff]
    %v480 = vlaneseq
    %v481 = vshrl.u32 %v480, 7
    %v482 = vsub.s32 1, %v481
    %v483 = vrot.slane %v282, %v482
    %484 = vmatprep.subr.mxu0 0.0
    %485 = vmatpush1.msra.mxu0 %v464
    %486 = vmatprep.subr.mxu0 0.0
    %487 = vmatpush1.msra.mxu0 %v465
    %488 = vmatprep.subr.mxu0 0.0
    %489 = vmatpush1.msra.mxu0 %v466
    %490 = vmatprep.subr.mxu0 0.0
    %491 = vmatpush1.msra.mxu0 %v467
    %492 = vmatprep.subr.mxu0 0.0
    %493 = vmatpush1.msra.mxu0 %v468
    %494 = vmatprep.subr.mxu0 0.0
    %495 = vmatpush1.msra.mxu0 %v469
    %496 = vmatprep.subr.mxu0 0.0
    %497 = vmatpush1.msra.mxu0 %v470
    %498 = vmatprep.subr.mxu0 0.0
    %499 = vmatpush1.msra.mxu0 %v471
    %500 = vmatprep.subr.mxu0 0.0
    %501 = vmatpush1.msra.mxu0 %v472
    %502 = vmatprep.subr.mxu0 0.0
    %503 = vmatpush1.msra.mxu0 %v473
    %504 = vmatprep.subr.mxu0 0.0
    %505 = vmatpush1.msra.mxu0 %v474
    %506 = vmatprep.subr.mxu0 0.0
    %507 = vmatpush1.msra.mxu0 %v475
    %508 = vmatprep.subr.mxu0 0.0
    %509 = vmatpush1.msra.mxu0 %v476
    %510 = vmatprep.subr.mxu0 0.0
    %511 = vmatpush1.msra.mxu0 %v477
    %512 = vmatprep.subr.mxu0 0.0
    %513 = vmatpush1.msra.mxu0 %v478
    %514 = vmatprep.subr.mxu0 0.0
    %515 = vmatpush1.msra.mxu0 %v479
    %516 = vmatprep.subr.mxu0 0.0
    %517 = vmatpush1.msra.mxu0 0.0
    %518 = vmatprep.subr.mxu0 0.0
    %519 = vmatpush1.msra.mxu0 0.0
    %520 = vmatprep.subr.mxu0 0.0
    %521 = vmatpush1.msra.mxu0 0.0
    %522 = vmatprep.subr.mxu0 0.0
    %523 = vmatpush1.msra.mxu0 0.0
    %524 = vmatprep.subr.mxu0 0.0
    %525 = vmatpush1.msra.mxu0 0.0
    %526 = vmatprep.subr.mxu0 0.0
    %527 = vmatpush1.msra.mxu0 0.0
    %528 = vmatprep.subr.mxu0 0.0
    %529 = vmatpush1.msra.mxu0 0.0
    %530 = vmatprep.subr.mxu0 0.0
    %531 = vmatpush1.msra.mxu0 0.0
    %532 = vmatprep.subr.mxu0 0.0
    %533 = vmatpush1.msra.mxu0 0.0
    %534 = vmatprep.subr.mxu0 0.0
    %535 = vmatpush1.msra.mxu0 0.0
    %536 = vmatprep.subr.mxu0 0.0
    %537 = vmatpush1.msra.mxu0 0.0
    %538 = vmatprep.subr.mxu0 0.0
    %539 = vmatpush1.msra.mxu0 0.0
    %540 = vmatprep.subr.mxu0 0.0
    %541 = vmatpush1.msra.mxu0 0.0
    %542 = vmatprep.subr.mxu0 0.0
    %543 = vmatpush1.msra.mxu0 0.0
    %544 = vmatprep.subr.mxu0 0.0
    %545 = vmatpush1.msra.mxu0 0.0
    %546 = vmatprep.subr.mxu0 0.0
    %547 = vmatpush1.msra.mxu0 0.0
    %548 = vmatprep.mubr.f32.mxu0 0.0
    %549 = vmatmul.mubr.f32.gmra.mrb[0].mxu0 %v448
    %v550 = vpop.f32.mrb[0].mxu0
    %v551 = vadd.f32 %v483, %v550
    %v552 = vpop.f32.mrb[0].mxu0
    %553 = vmatprep.mubr.f32.mxu0 0.0
    %554 = vmatmul.mubr.f32.gmra.mrb[0].mxu0 %v449
    %v555 = vpop.f32.mrb[0].mxu0
    %v556 = vadd.f32 %v483, %v555
    %v557 = vpop.f32.mrb[0].mxu0
    %558 = vmatprep.mubr.f32.mxu0 0.0
    %559 = vmatmul.mubr.f32.gmra.mrb[0].mxu0 %v450
    %v560 = vpop.f32.mrb[0].mxu0
    %v561 = vadd.f32 %v483, %v560
    %v562 = vpop.f32.mrb[0].mxu0
    %563 = vmatprep.mubr.f32.mxu0 0.0
    %564 = vmatmul.mubr.f32.gmra.mrb[0].mxu0 %v451
    %v565 = vpop.f32.mrb[0].mxu0
    %v566 = vadd.f32 %v483, %v565
    %v567 = vpop.f32.mrb[0].mxu0
    %568 = vmatprep.mubr.f32.mxu0 0.0
    %569 = vmatmul.mubr.f32.gmra.mrb[0].mxu0 %v452
    %v570 = vpop.f32.mrb[0].mxu0
    %v571 = vadd.f32 %v483, %v570
    %v572 = vpop.f32.mrb[0].mxu0
    %573 = vmatprep.mubr.f32.mxu0 0.0
    %574 = vmatmul.mubr.f32.gmra.mrb[0].mxu0 %v453
    %v575 = vpop.f32.mrb[0].mxu0
    %v576 = vadd.f32 %v483, %v575
    %v577 = vpop.f32.mrb[0].mxu0
    %578 = vmatprep.mubr.f32.mxu0 0.0
    %579 = vmatmul.mubr.f32.gmra.mrb[0].mxu0 %v454
    %v580 = vpop.f32.mrb[0].mxu0
    %v581 = vadd.f32 %v483, %v580
    %v582 = vpop.f32.mrb[0].mxu0
    %583 = vmatprep.mubr.f32.mxu0 0.0
    %584 = vmatmul.mubr.f32.gmra.mrb[0].mxu0 %v455
    %v585 = vpop.f32.mrb[0].mxu0
    %v586 = vadd.f32 %v483, %v585
    %v587 = vpop.f32.mrb[0].mxu0
    %588 = vmatprep.mubr.f32.mxu0 0.0
    %589 = vmatmul.mubr.f32.gmra.mrb[0].mxu0 %v456
    %v590 = vpop.f32.mrb[0].mxu0
    %v591 = vadd.f32 %v483, %v590
    %v592 = vpop.f32.mrb[0].mxu0
    %593 = vmatprep.mubr.f32.mxu0 0.0
    %594 = vmatmul.mubr.f32.gmra.mrb[0].mxu0 %v457
    %v595 = vpop.f32.mrb[0].mxu0
    %v596 = vadd.f32 %v483, %v595
    %v597 = vpop.f32.mrb[0].mxu0
    %598 = vmatprep.mubr.f32.mxu0 0.0
    %599 = vmatmul.mubr.f32.gmra.mrb[0].mxu0 %v458
    %v600 = vpop.f32.mrb[0].mxu0
    %v601 = vadd.f32 %v483, %v600
    %v602 = vpop.f32.mrb[0].mxu0
    %603 = vmatprep.mubr.f32.mxu0 0.0
    %604 = vmatmul.mubr.f32.gmra.mrb[0].mxu0 %v459
    %v605 = vpop.f32.mrb[0].mxu0
    %v606 = vadd.f32 %v483, %v605
    %v607 = vpop.f32.mrb[0].mxu0
    %608 = vmatprep.mubr.f32.mxu0 0.0
    %609 = vmatmul.mubr.f32.gmra.mrb[0].mxu0 %v460
    %v610 = vpop.f32.mrb[0].mxu0
    %v611 = vadd.f32 %v483, %v610
    %v612 = vpop.f32.mrb[0].mxu0
    %613 = vmatprep.mubr.f32.mxu0 0.0
    %614 = vmatmul.mubr.f32.gmra.mrb[0].mxu0 %v461
    %v615 = vpop.f32.mrb[0].mxu0
    %v616 = vadd.f32 %v483, %v615
    %v617 = vpop.f32.mrb[0].mxu0
    %618 = vmatprep.mubr.f32.mxu0 0.0
    %619 = vmatmul.mubr.f32.gmra.mrb[0].mxu0 %v462
    %v620 = vpop.f32.mrb[0].mxu0
    %v621 = vadd.f32 %v483, %v620
    %v622 = vpop.f32.mrb[0].mxu0
    %623 = vmatprep.mubr.f32.mxu0 0.0
    %624 = vmatmul.mubr.f32.gmra.mrb[0].mxu0 %v463
    %v625 = vpop.f32.mrb[0].mxu0
    %v626 = vadd.f32 %v483, %v625
    %v627 = vpop.f32.mrb[0].mxu0
    %628 = vdwg.mxu0
    %v629 = vmax.f32 %v551, 0.0
    %v630 = vmax.f32 %v556, 0.0
    %v631 = vmax.f32 %v561, 0.0
    %v632 = vmax.f32 %v566, 0.0
    %v633 = vmax.f32 %v571, 0.0
    %v634 = vmax.f32 %v576, 0.0
    %v635 = vmax.f32 %v581, 0.0
    %v636 = vmax.f32 %v586, 0.0
    %v637 = vmax.f32 %v591, 0.0
    %v638 = vmax.f32 %v596, 0.0
    %v639 = vmax.f32 %v601, 0.0
    %v640 = vmax.f32 %v606, 0.0
    %v641 = vmax.f32 %v611, 0.0
    %v642 = vmax.f32 %v616, 0.0
    %v643 = vmax.f32 %v621, 0.0
    %v644 = vmax.f32 %v626, 0.0
    %645 = vmatprep.subr.mxu0 0.0
    %646 = vmatpush1.msra.mxu0 %v629
    %647 = vmatprep.subr.mxu0 0.0
    %648 = vmatpush1.msra.mxu0 %v630
    %649 = vmatprep.subr.mxu0 0.0
    %650 = vmatpush1.msra.mxu0 %v631
    %651 = vmatprep.subr.mxu0 0.0
    %652 = vmatpush1.msra.mxu0 %v632
    %653 = vmatprep.subr.mxu0 0.0
    %654 = vmatpush1.msra.mxu0 %v633
    %655 = vmatprep.subr.mxu0 0.0
    %656 = vmatpush1.msra.mxu0 %v634
    %657 = vmatprep.subr.mxu0 0.0
    %658 = vmatpush1.msra.mxu0 %v635
    %659 = vmatprep.subr.mxu0 0.0
    %660 = vmatpush1.msra.mxu0 %v636
    %661 = vmatprep.subr.mxu0 0.0
    %662 = vmatpush1.msra.mxu0 %v637
    %663 = vmatprep.subr.mxu0 0.0
    %664 = vmatpush1.msra.mxu0 %v638
    %665 = vmatprep.subr.mxu0 0.0
    %666 = vmatpush1.msra.mxu0 %v639
    %667 = vmatprep.subr.mxu0 0.0
    %668 = vmatpush1.msra.mxu0 %v640
    %669 = vmatprep.subr.mxu0 0.0
    %670 = vmatpush1.msra.mxu0 %v641
    %671 = vmatprep.subr.mxu0 0.0
    %672 = vmatpush1.msra.mxu0 %v642
    %673 = vmatprep.subr.mxu0 0.0
    %674 = vmatpush1.msra.mxu0 %v643
    %675 = vmatprep.subr.mxu0 0.0
    %676 = vmatpush1.msra.mxu0 %v644
    %677 = vmatprep.subr.mxu0 0.0
    %678 = vmatpush1.msra.mxu0 0.0
    %679 = vmatprep.subr.mxu0 0.0
    %680 = vmatpush1.msra.mxu0 0.0
    %681 = vmatprep.subr.mxu0 0.0
    %682 = vmatpush1.msra.mxu0 0.0
    %683 = vmatprep.subr.mxu0 0.0
    %684 = vmatpush1.msra.mxu0 0.0
    %685 = vmatprep.subr.mxu0 0.0
    %686 = vmatpush1.msra.mxu0 0.0
    %687 = vmatprep.subr.mxu0 0.0
    %688 = vmatpush1.msra.mxu0 0.0
    %689 = vmatprep.subr.mxu0 0.0
    %690 = vmatpush1.msra.mxu0 0.0
    %691 = vmatprep.subr.mxu0 0.0
    %692 = vmatpush1.msra.mxu0 0.0
    %693 = vmatprep.subr.mxu0 0.0
    %694 = vmatpush1.msra.mxu0 0.0
    %695 = vmatprep.subr.mxu0 0.0
    %696 = vmatpush1.msra.mxu0 0.0
    %697 = vmatprep.subr.mxu0 0.0
    %698 = vmatpush1.msra.mxu0 0.0
    %699 = vmatprep.subr.mxu0 0.0
    %700 = vmatpush1.msra.mxu0 0.0
    %701 = vmatprep.subr.mxu0 0.0
    %702 = vmatpush1.msra.mxu0 0.0
    %703 = vmatprep.subr.mxu0 0.0
    %704 = vmatpush1.msra.mxu0 0.0
    %705 = vmatprep.subr.mxu0 0.0
    %706 = vmatpush1.msra.mxu0 0.0
    %707 = vmatprep.subr.mxu0 0.0
    %708 = vmatpush1.msra.mxu0 0.0
    %709 = vmatprep.mubr.f32.mxu0 0.0
    %710 = vmatmul.mubr.f32.gmra.mrb[0].mxu0 %v89
    %v711 = vpop.f32.mrb[0].mxu0
    %v712 = vadd.f32 0.0, %v711
    %v713 = vpop.f32.mrb[0].mxu0
    %714 = vmatprep.mubr.f32.mxu0 0.0
    %715 = vmatmul.mubr.f32.gmra.mrb[0].mxu0 %v90
    %v716 = vpop.f32.mrb[0].mxu0
    %v717 = vadd.f32 0.0, %v716
    %v718 = vpop.f32.mrb[0].mxu0
    %719 = vmatprep.mubr.f32.mxu0 0.0
    %720 = vmatmul.mubr.f32.gmra.mrb[0].mxu0 %v91
    %v721 = vpop.f32.mrb[0].mxu0
    %v722 = vadd.f32 0.0, %v721
    %v723 = vpop.f32.mrb[0].mxu0
    %724 = vmatprep.mubr.f32.mxu0 0.0
    %725 = vmatmul.mubr.f32.gmra.mrb[0].mxu0 %v92
    %v726 = vpop.f32.mrb[0].mxu0
    %v727 = vadd.f32 0.0, %v726
    %v728 = vpop.f32.mrb[0].mxu0
    %729 = vmatprep.mubr.f32.mxu0 0.0
    %730 = vmatmul.mubr.f32.gmra.mrb[0].mxu0 %v93
    %v731 = vpop.f32.mrb[0].mxu0
    %v732 = vadd.f32 0.0, %v731
    %v733 = vpop.f32.mrb[0].mxu0
    %734 = vmatprep.mubr.f32.mxu0 0.0
    %735 = vmatmul.mubr.f32.gmra.mrb[0].mxu0 %v94
    %v736 = vpop.f32.mrb[0].mxu0
    %v737 = vadd.f32 0.0, %v736
    %v738 = vpop.f32.mrb[0].mxu0
    %739 = vmatprep.mubr.f32.mxu0 0.0
    %740 = vmatmul.mubr.f32.gmra.mrb[0].mxu0 %v95
    %v741 = vpop.f32.mrb[0].mxu0
    %v742 = vadd.f32 0.0, %v741
    %v743 = vpop.f32.mrb[0].mxu0
    %744 = vmatprep.mubr.f32.mxu0 0.0
    %745 = vmatmul.mubr.f32.gmra.mrb[0].mxu0 %v96
    %v746 = vpop.f32.mrb[0].mxu0
    %v747 = vadd.f32 0.0, %v746
    %v748 = vpop.f32.mrb[0].mxu0
    %749 = vmatprep.mubr.f32.mxu0 0.0
    %750 = vmatmul.mubr.f32.gmra.mrb[0].mxu0 %v97
    %v751 = vpop.f32.mrb[0].mxu0
    %v752 = vadd.f32 0.0, %v751
    %v753 = vpop.f32.mrb[0].mxu0
    %754 = vmatprep.mubr.f32.mxu0 0.0
    %755 = vmatmul.mubr.f32.gmra.mrb[0].mxu0 %v98
    %v756 = vpop.f32.mrb[0].mxu0
    %v757 = vadd.f32 0.0, %v756
    %v758 = vpop.f32.mrb[0].mxu0
    %759 = vmatprep.mubr.f32.mxu0 0.0
    %760 = vmatmul.mubr.f32.gmra.mrb[0].mxu0 %v99
    %v761 = vpop.f32.mrb[0].mxu0
    %v762 = vadd.f32 0.0, %v761
    %v763 = vpop.f32.mrb[0].mxu0
    %764 = vmatprep.mubr.f32.mxu0 0.0
    %765 = vmatmul.mubr.f32.gmra.mrb[0].mxu0 %v100
    %v766 = vpop.f32.mrb[0].mxu0
    %v767 = vadd.f32 0.0, %v766
    %v768 = vpop.f32.mrb[0].mxu0
    %769 = vmatprep.mubr.f32.mxu0 0.0
    %770 = vmatmul.mubr.f32.gmra.mrb[0].mxu0 %v101
    %v771 = vpop.f32.mrb[0].mxu0
    %v772 = vadd.f32 0.0, %v771
    %v773 = vpop.f32.mrb[0].mxu0
    %774 = vmatprep.mubr.f32.mxu0 0.0
    %775 = vmatmul.mubr.f32.gmra.mrb[0].mxu0 %v102
    %v776 = vpop.f32.mrb[0].mxu0
    %v777 = vadd.f32 0.0, %v776
    %v778 = vpop.f32.mrb[0].mxu0
    %779 = vmatprep.mubr.f32.mxu0 0.0
    %780 = vmatmul.mubr.f32.gmra.mrb[0].mxu0 %v103
    %v781 = vpop.f32.mrb[0].mxu0
    %v782 = vadd.f32 0.0, %v781
    %v783 = vpop.f32.mrb[0].mxu0
    %784 = vmatprep.mubr.f32.mxu0 0.0
    %785 = vmatmul.mubr.f32.gmra.mrb[0].mxu0 %v104
    %v786 = vpop.f32.mrb[0].mxu0
    %v787 = vadd.f32 0.0, %v786
    %v788 = vpop.f32.mrb[0].mxu0
    %789 = vdwg.mxu0
    %v790 = vadd.f32 %v629, %v712
    %v791 = vadd.f32 %v630, %v717
    %v792 = vadd.f32 %v631, %v722
    %v793 = vadd.f32 %v632, %v727
    %v794 = vadd.f32 %v633, %v732
    %v795 = vadd.f32 %v634, %v737
    %v796 = vadd.f32 %v635, %v742
    %v797 = vadd.f32 %v636, %v747
    %v798 = vadd.f32 %v637, %v752
    %v799 = vadd.f32 %v638, %v757
    %v800 = vadd.f32 %v639, %v762
    %v801 = vadd.f32 %v640, %v767
    %v802 = vadd.f32 %v641, %v772
    %v803 = vadd.f32 %v642, %v777
    %v804 = vadd.f32 %v643, %v782
    %v805 = vadd.f32 %v644, %v787
    %s806 = scalar_lea.vmem [#allocation10], 8
    %v807 = vld [vmem:[%s806] sm:$0xff]
    %s808 = scalar_lea.vmem [#allocation7], 128
    %v809 = vld [vmem:[%s808] sm:$0xff]
    %v810 = vld [vmem:[%s808 + $0x8] sm:$0xff]
    %v811 = vld [vmem:[%s808 + $0x10] sm:$0xff]
    %v812 = vld [vmem:[%s808 + $0x18] sm:$0xff]
    %v813 = vld [vmem:[%s808 + $0x20] sm:$0xff]
    %v814 = vld [vmem:[%s808 + $0x28] sm:$0xff]
    %v815 = vld [vmem:[%s808 + $0x30] sm:$0xff]
    %v816 = vld [vmem:[%s808 + $0x38] sm:$0xff]
    %v817 = vld [vmem:[%s808 + $0x40] sm:$0xff]
    %v818 = vld [vmem:[%s808 + $0x48] sm:$0xff]
    %v819 = vld [vmem:[%s808 + $0x50] sm:$0xff]
    %v820 = vld [vmem:[%s808 + $0x58] sm:$0xff]
    %v821 = vld [vmem:[%s808 + $0x60] sm:$0xff]
    %v822 = vld [vmem:[%s808 + $0x68] sm:$0xff]
    %v823 = vld [vmem:[%s808 + $0x70] sm:$0xff]
    %v824 = vld [vmem:[%s808 + $0x78] sm:$0xff]
    %v825 = vlaneseq
    %v826 = vshrl.u32 %v825, 7
    %v827 = vsub.s32 0, %v826
    %v828 = vrot.slane %v807, %v827
    %829 = vmatprep.subr.mxu0 0.0
    %830 = vmatpush1.msra.mxu0 %v809
    %831 = vmatprep.subr.mxu0 0.0
    %832 = vmatpush1.msra.mxu0 %v810
    %833 = vmatprep.subr.mxu0 0.0
    %834 = vmatpush1.msra.mxu0 %v811
    %835 = vmatprep.subr.mxu0 0.0
    %836 = vmatpush1.msra.mxu0 %v812
    %837 = vmatprep.subr.mxu0 0.0
    %838 = vmatpush1.msra.mxu0 %v813
    %839 = vmatprep.subr.mxu0 0.0
    %840 = vmatpush1.msra.mxu0 %v814
    %841 = vmatprep.subr.mxu0 0.0
    %842 = vmatpush1.msra.mxu0 %v815
    %843 = vmatprep.subr.mxu0 0.0
    %844 = vmatpush1.msra.mxu0 %v816
    %845 = vmatprep.subr.mxu0 0.0
    %846 = vmatpush1.msra.mxu0 %v817
    %847 = vmatprep.subr.mxu0 0.0
    %848 = vmatpush1.msra.mxu0 %v818
    %849 = vmatprep.subr.mxu0 0.0
    %850 = vmatpush1.msra.mxu0 %v819
    %851 = vmatprep.subr.mxu0 0.0
    %852 = vmatpush1.msra.mxu0 %v820
    %853 = vmatprep.subr.mxu0 0.0
    %854 = vmatpush1.msra.mxu0 %v821
    %855 = vmatprep.subr.mxu0 0.0
    %856 = vmatpush1.msra.mxu0 %v822
    %857 = vmatprep.subr.mxu0 0.0
    %858 = vmatpush1.msra.mxu0 %v823
    %859 = vmatprep.subr.mxu0 0.0
    %860 = vmatpush1.msra.mxu0 %v824
    %861 = vmatprep.subr.mxu0 0.0
    %862 = vmatpush1.msra.mxu0 0.0
    %863 = vmatprep.subr.mxu0 0.0
    %864 = vmatpush1.msra.mxu0 0.0
    %865 = vmatprep.subr.mxu0 0.0
    %866 = vmatpush1.msra.mxu0 0.0
    %867 = vmatprep.subr.mxu0 0.0
    %868 = vmatpush1.msra.mxu0 0.0
    %869 = vmatprep.subr.mxu0 0.0
    %870 = vmatpush1.msra.mxu0 0.0
    %871 = vmatprep.subr.mxu0 0.0
    %872 = vmatpush1.msra.mxu0 0.0
    %873 = vmatprep.subr.mxu0 0.0
    %874 = vmatpush1.msra.mxu0 0.0
    %875 = vmatprep.subr.mxu0 0.0
    %876 = vmatpush1.msra.mxu0 0.0
    %877 = vmatprep.subr.mxu0 0.0
    %878 = vmatpush1.msra.mxu0 0.0
    %879 = vmatprep.subr.mxu0 0.0
    %880 = vmatpush1.msra.mxu0 0.0
    %881 = vmatprep.subr.mxu0 0.0
    %882 = vmatpush1.msra.mxu0 0.0
    %883 = vmatprep.subr.mxu0 0.0
    %884 = vmatpush1.msra.mxu0 0.0
    %885 = vmatprep.subr.mxu0 0.0
    %886 = vmatpush1.msra.mxu0 0.0
    %887 = vmatprep.subr.mxu0 0.0
    %888 = vmatpush1.msra.mxu0 0.0
    %889 = vmatprep.subr.mxu0 0.0
    %890 = vmatpush1.msra.mxu0 0.0
    %891 = vmatprep.subr.mxu0 0.0
    %892 = vmatpush1.msra.mxu0 0.0
    %893 = vmatprep.mubr.f32.mxu0 0.0
    %894 = vmatmul.mubr.f32.gmra.mrb[0].mxu0 %v790
    %v895 = vpop.f32.mrb[0].mxu0
    %v896 = vadd.f32 %v828, %v895
    %v897 = vpop.f32.mrb[0].mxu0
    %898 = vmatprep.mubr.f32.mxu0 0.0
    %899 = vmatmul.mubr.f32.gmra.mrb[0].mxu0 %v791
    %v900 = vpop.f32.mrb[0].mxu0
    %v901 = vadd.f32 %v828, %v900
    %v902 = vpop.f32.mrb[0].mxu0
    %903 = vmatprep.mubr.f32.mxu0 0.0
    %904 = vmatmul.mubr.f32.gmra.mrb[0].mxu0 %v792
    %v905 = vpop.f32.mrb[0].mxu0
    %v906 = vadd.f32 %v828, %v905
    %v907 = vpop.f32.mrb[0].mxu0
    %908 = vmatprep.mubr.f32.mxu0 0.0
    %909 = vmatmul.mubr.f32.gmra.mrb[0].mxu0 %v793
    %v910 = vpop.f32.mrb[0].mxu0
    %v911 = vadd.f32 %v828, %v910
    %v912 = vpop.f32.mrb[0].mxu0
    %913 = vmatprep.mubr.f32.mxu0 0.0
    %914 = vmatmul.mubr.f32.gmra.mrb[0].mxu0 %v794
    %v915 = vpop.f32.mrb[0].mxu0
    %v916 = vadd.f32 %v828, %v915
    %v917 = vpop.f32.mrb[0].mxu0
    %918 = vmatprep.mubr.f32.mxu0 0.0
    %919 = vmatmul.mubr.f32.gmra.mrb[0].mxu0 %v795
    %v920 = vpop.f32.mrb[0].mxu0
    %v921 = vadd.f32 %v828, %v920
    %v922 = vpop.f32.mrb[0].mxu0
    %923 = vmatprep.mubr.f32.mxu0 0.0
    %924 = vmatmul.mubr.f32.gmra.mrb[0].mxu0 %v796
    %v925 = vpop.f32.mrb[0].mxu0
    %v926 = vadd.f32 %v828, %v925
    %v927 = vpop.f32.mrb[0].mxu0
    %928 = vmatprep.mubr.f32.mxu0 0.0
    %929 = vmatmul.mubr.f32.gmra.mrb[0].mxu0 %v797
    %v930 = vpop.f32.mrb[0].mxu0
    %v931 = vadd.f32 %v828, %v930
    %v932 = vpop.f32.mrb[0].mxu0
    %933 = vmatprep.mubr.f32.mxu0 0.0
    %934 = vmatmul.mubr.f32.gmra.mrb[0].mxu0 %v798
    %v935 = vpop.f32.mrb[0].mxu0
    %v936 = vadd.f32 %v828, %v935
    %v937 = vpop.f32.mrb[0].mxu0
    %938 = vmatprep.mubr.f32.mxu0 0.0
    %939 = vmatmul.mubr.f32.gmra.mrb[0].mxu0 %v799
    %v940 = vpop.f32.mrb[0].mxu0
    %v941 = vadd.f32 %v828, %v940
    %v942 = vpop.f32.mrb[0].mxu0
    %943 = vmatprep.mubr.f32.mxu0 0.0
    %944 = vmatmul.mubr.f32.gmra.mrb[0].mxu0 %v800
    %v945 = vpop.f32.mrb[0].mxu0
    %v946 = vadd.f32 %v828, %v945
    %v947 = vpop.f32.mrb[0].mxu0
    %948 = vmatprep.mubr.f32.mxu0 0.0
    %949 = vmatmul.mubr.f32.gmra.mrb[0].mxu0 %v801
    %v950 = vpop.f32.mrb[0].mxu0
    %v951 = vadd.f32 %v828, %v950
    %v952 = vpop.f32.mrb[0].mxu0
    %953 = vmatprep.mubr.f32.mxu0 0.0
    %954 = vmatmul.mubr.f32.gmra.mrb[0].mxu0 %v802
    %v955 = vpop.f32.mrb[0].mxu0
    %v956 = vadd.f32 %v828, %v955
    %v957 = vpop.f32.mrb[0].mxu0
    %958 = vmatprep.mubr.f32.mxu0 0.0
    %959 = vmatmul.mubr.f32.gmra.mrb[0].mxu0 %v803
    %v960 = vpop.f32.mrb[0].mxu0
    %v961 = vadd.f32 %v828, %v960
    %v962 = vpop.f32.mrb[0].mxu0
    %963 = vmatprep.mubr.f32.mxu0 0.0
    %964 = vmatmul.mubr.f32.gmra.mrb[0].mxu0 %v804
    %v965 = vpop.f32.mrb[0].mxu0
    %v966 = vadd.f32 %v828, %v965
    %v967 = vpop.f32.mrb[0].mxu0
    %968 = vmatprep.mubr.f32.mxu0 0.0
    %969 = vmatmul.mubr.f32.gmra.mrb[0].mxu0 %v805
    %v970 = vpop.f32.mrb[0].mxu0
    %v971 = vadd.f32 %v828, %v970
    %v972 = vpop.f32.mrb[0].mxu0
    %973 = vdwg.mxu0
    %v974 = vmax.f32 %v896, 0.0
    %v975 = vmax.f32 %v901, 0.0
    %v976 = vmax.f32 %v906, 0.0
    %v977 = vmax.f32 %v911, 0.0
    %v978 = vmax.f32 %v916, 0.0
    %v979 = vmax.f32 %v921, 0.0
    %v980 = vmax.f32 %v926, 0.0
    %v981 = vmax.f32 %v931, 0.0
    %v982 = vmax.f32 %v936, 0.0
    %v983 = vmax.f32 %v941, 0.0
    %v984 = vmax.f32 %v946, 0.0
    %v985 = vmax.f32 %v951, 0.0
    %v986 = vmax.f32 %v956, 0.0
    %v987 = vmax.f32 %v961, 0.0
    %v988 = vmax.f32 %v966, 0.0
    %v989 = vmax.f32 %v971, 0.0
    %s990 = scalar_lea.vmem [#allocation8], 128
    %v991 = vld [vmem:[%s990] sm:$0xff]
    %v992 = vld [vmem:[%s990 + $0x8] sm:$0xff]
    %v993 = vld [vmem:[%s990 + $0x10] sm:$0xff]
    %v994 = vld [vmem:[%s990 + $0x18] sm:$0xff]
    %v995 = vld [vmem:[%s990 + $0x20] sm:$0xff]
    %v996 = vld [vmem:[%s990 + $0x28] sm:$0xff]
    %v997 = vld [vmem:[%s990 + $0x30] sm:$0xff]
    %v998 = vld [vmem:[%s990 + $0x38] sm:$0xff]
    %v999 = vld [vmem:[%s990 + $0x40] sm:$0xff]
    %v1000 = vld [vmem:[%s990 + $0x48] sm:$0xff]
    %v1001 = vld [vmem:[%s990 + $0x50] sm:$0xff]
    %v1002 = vld [vmem:[%s990 + $0x58] sm:$0xff]
    %v1003 = vld [vmem:[%s990 + $0x60] sm:$0xff]
    %v1004 = vld [vmem:[%s990 + $0x68] sm:$0xff]
    %v1005 = vld [vmem:[%s990 + $0x70] sm:$0xff]
    %v1006 = vld [vmem:[%s990 + $0x78] sm:$0xff]
    %v1007 = vlaneseq
    %v1008 = vshrl.u32 %v1007, 7
    %v1009 = vsub.s32 1, %v1008
    %v1010 = vrot.slane %v807, %v1009
    %1011 = vmatprep.subr.mxu0 0.0
    %1012 = vmatpush1.msra.mxu0 %v991
    %1013 = vmatprep.subr.mxu0 0.0
    %1014 = vmatpush1.msra.mxu0 %v992
    %1015 = vmatprep.subr.mxu0 0.0
    %1016 = vmatpush1.msra.mxu0 %v993
    %1017 = vmatprep.subr.mxu0 0.0
    %1018 = vmatpush1.msra.mxu0 %v994
    %1019 = vmatprep.subr.mxu0 0.0
    %1020 = vmatpush1.msra.mxu0 %v995
    %1021 = vmatprep.subr.mxu0 0.0
    %1022 = vmatpush1.msra.mxu0 %v996
    %1023 = vmatprep.subr.mxu0 0.0
    %1024 = vmatpush1.msra.mxu0 %v997
    %1025 = vmatprep.subr.mxu0 0.0
    %1026 = vmatpush1.msra.mxu0 %v998
    %1027 = vmatprep.subr.mxu0 0.0
    %1028 = vmatpush1.msra.mxu0 %v999
    %1029 = vmatprep.subr.mxu0 0.0
    %1030 = vmatpush1.msra.mxu0 %v1000
    %1031 = vmatprep.subr.mxu0 0.0
    %1032 = vmatpush1.msra.mxu0 %v1001
    %1033 = vmatprep.subr.mxu0 0.0
    %1034 = vmatpush1.msra.mxu0 %v1002
    %1035 = vmatprep.subr.mxu0 0.0
    %1036 = vmatpush1.msra.mxu0 %v1003
    %1037 = vmatprep.subr.mxu0 0.0
    %1038 = vmatpush1.msra.mxu0 %v1004
    %1039 = vmatprep.subr.mxu0 0.0
    %1040 = vmatpush1.msra.mxu0 %v1005
    %1041 = vmatprep.subr.mxu0 0.0
    %1042 = vmatpush1.msra.mxu0 %v1006
    %1043 = vmatprep.subr.mxu0 0.0
    %1044 = vmatpush1.msra.mxu0 0.0
    %1045 = vmatprep.subr.mxu0 0.0
    %1046 = vmatpush1.msra.mxu0 0.0
    %1047 = vmatprep.subr.mxu0 0.0
    %1048 = vmatpush1.msra.mxu0 0.0
    %1049 = vmatprep.subr.mxu0 0.0
    %1050 = vmatpush1.msra.mxu0 0.0
    %1051 = vmatprep.subr.mxu0 0.0
    %1052 = vmatpush1.msra.mxu0 0.0
    %1053 = vmatprep.subr.mxu0 0.0
    %1054 = vmatpush1.msra.mxu0 0.0
    %1055 = vmatprep.subr.mxu0 0.0
    %1056 = vmatpush1.msra.mxu0 0.0
    %1057 = vmatprep.subr.mxu0 0.0
    %1058 = vmatpush1.msra.mxu0 0.0
    %1059 = vmatprep.subr.mxu0 0.0
    %1060 = vmatpush1.msra.mxu0 0.0
    %1061 = vmatprep.subr.mxu0 0.0
    %1062 = vmatpush1.msra.mxu0 0.0
    %1063 = vmatprep.subr.mxu0 0.0
    %1064 = vmatpush1.msra.mxu0 0.0
    %1065 = vmatprep.subr.mxu0 0.0
    %1066 = vmatpush1.msra.mxu0 0.0
    %1067 = vmatprep.subr.mxu0 0.0
    %1068 = vmatpush1.msra.mxu0 0.0
    %1069 = vmatprep.subr.mxu0 0.0
    %1070 = vmatpush1.msra.mxu0 0.0
    %1071 = vmatprep.subr.mxu0 0.0
    %1072 = vmatpush1.msra.mxu0 0.0
    %1073 = vmatprep.subr.mxu0 0.0
    %1074 = vmatpush1.msra.mxu0 0.0
    %1075 = vmatprep.mubr.f32.mxu0 0.0
    %1076 = vmatmul.mubr.f32.gmra.mrb[0].mxu0 %v974
    %v1077 = vpop.f32.mrb[0].mxu0
    %v1078 = vadd.f32 %v1010, %v1077
    %v1079 = vpop.f32.mrb[0].mxu0
    %1080 = vmatprep.mubr.f32.mxu0 0.0
    %1081 = vmatmul.mubr.f32.gmra.mrb[0].mxu0 %v975
    %v1082 = vpop.f32.mrb[0].mxu0
    %v1083 = vadd.f32 %v1010, %v1082
    %v1084 = vpop.f32.mrb[0].mxu0
    %1085 = vmatprep.mubr.f32.mxu0 0.0
    %1086 = vmatmul.mubr.f32.gmra.mrb[0].mxu0 %v976
    %v1087 = vpop.f32.mrb[0].mxu0
    %v1088 = vadd.f32 %v1010, %v1087
    %v1089 = vpop.f32.mrb[0].mxu0
    %1090 = vmatprep.mubr.f32.mxu0 0.0
    %1091 = vmatmul.mubr.f32.gmra.mrb[0].mxu0 %v977
    %v1092 = vpop.f32.mrb[0].mxu0
    %v1093 = vadd.f32 %v1010, %v1092
    %v1094 = vpop.f32.mrb[0].mxu0
    %1095 = vmatprep.mubr.f32.mxu0 0.0
    %1096 = vmatmul.mubr.f32.gmra.mrb[0].mxu0 %v978
    %v1097 = vpop.f32.mrb[0].mxu0
    %v1098 = vadd.f32 %v1010, %v1097
    %v1099 = vpop.f32.mrb[0].mxu0
    %1100 = vmatprep.mubr.f32.mxu0 0.0
    %1101 = vmatmul.mubr.f32.gmra.mrb[0].mxu0 %v979
    %v1102 = vpop.f32.mrb[0].mxu0
    %v1103 = vadd.f32 %v1010, %v1102
    %v1104 = vpop.f32.mrb[0].mxu0
    %1105 = vmatprep.mubr.f32.mxu0 0.0
    %1106 = vmatmul.mubr.f32.gmra.mrb[0].mxu0 %v980
    %v1107 = vpop.f32.mrb[0].mxu0
    %v1108 = vadd.f32 %v1010, %v1107
    %v1109 = vpop.f32.mrb[0].mxu0
    %1110 = vmatprep.mubr.f32.mxu0 0.0
    %1111 = vmatmul.mubr.f32.gmra.mrb[0].mxu0 %v981
    %v1112 = vpop.f32.mrb[0].mxu0
    %v1113 = vadd.f32 %v1010, %v1112
    %v1114 = vpop.f32.mrb[0].mxu0
    %1115 = vmatprep.mubr.f32.mxu0 0.0
    %1116 = vmatmul.mubr.f32.gmra.mrb[0].mxu0 %v982
    %v1117 = vpop.f32.mrb[0].mxu0
    %v1118 = vadd.f32 %v1010, %v1117
    %v1119 = vpop.f32.mrb[0].mxu0
    %1120 = vmatprep.mubr.f32.mxu0 0.0
    %1121 = vmatmul.mubr.f32.gmra.mrb[0].mxu0 %v983
    %v1122 = vpop.f32.mrb[0].mxu0
    %v1123 = vadd.f32 %v1010, %v1122
    %v1124 = vpop.f32.mrb[0].mxu0
    %1125 = vmatprep.mubr.f32.mxu0 0.0
    %1126 = vmatmul.mubr.f32.gmra.mrb[0].mxu0 %v984
    %v1127 = vpop.f32.mrb[0].mxu0
    %v1128 = vadd.f32 %v1010, %v1127
    %v1129 = vpop.f32.mrb[0].mxu0
    %1130 = vmatprep.mubr.f32.mxu0 0.0
    %1131 = vmatmul.mubr.f32.gmra.mrb[0].mxu0 %v985
    %v1132 = vpop.f32.mrb[0].mxu0
    %v1133 = vadd.f32 %v1010, %v1132
    %v1134 = vpop.f32.mrb[0].mxu0
    %1135 = vmatprep.mubr.f32.mxu0 0.0
    %1136 = vmatmul.mubr.f32.gmra.mrb[0].mxu0 %v986
    %v1137 = vpop.f32.mrb[0].mxu0
    %v1138 = vadd.f32 %v1010, %v1137
    %v1139 = vpop.f32.mrb[0].mxu0
    %1140 = vmatprep.mubr.f32.mxu0 0.0
    %1141 = vmatmul.mubr.f32.gmra.mrb[0].mxu0 %v987
    %v1142 = vpop.f32.mrb[0].mxu0
    %v1143 = vadd.f32 %v1010, %v1142
    %v1144 = vpop.f32.mrb[0].mxu0
    %1145 = vmatprep.mubr.f32.mxu0 0.0
    %1146 = vmatmul.mubr.f32.gmra.mrb[0].mxu0 %v988
    %v1147 = vpop.f32.mrb[0].mxu0
    %v1148 = vadd.f32 %v1010, %v1147
    %v1149 = vpop.f32.mrb[0].mxu0
    %1150 = vmatprep.mubr.f32.mxu0 0.0
    %1151 = vmatmul.mubr.f32.gmra.mrb[0].mxu0 %v989
    %v1152 = vpop.f32.mrb[0].mxu0
    %v1153 = vadd.f32 %v1010, %v1152
    %v1154 = vpop.f32.mrb[0].mxu0
    %1155 = vdwg.mxu0
    %v1156 = vmax.f32 %v1078, 0.0
    %v1157 = vmax.f32 %v1083, 0.0
    %v1158 = vmax.f32 %v1088, 0.0
    %v1159 = vmax.f32 %v1093, 0.0
    %v1160 = vmax.f32 %v1098, 0.0
    %v1161 = vmax.f32 %v1103, 0.0
    %v1162 = vmax.f32 %v1108, 0.0
    %v1163 = vmax.f32 %v1113, 0.0
    %v1164 = vmax.f32 %v1118, 0.0
    %v1165 = vmax.f32 %v1123, 0.0
    %v1166 = vmax.f32 %v1128, 0.0
    %v1167 = vmax.f32 %v1133, 0.0
    %v1168 = vmax.f32 %v1138, 0.0
    %v1169 = vmax.f32 %v1143, 0.0
    %v1170 = vmax.f32 %v1148, 0.0
    %v1171 = vmax.f32 %v1153, 0.0
    %1172 = vst [vmem:[#allocation11] sm:$0xff] %v1156
    %1173 = vst [vmem:[#allocation11 + $0x8] sm:$0xff] %v1157
    %1174 = vst [vmem:[#allocation11 + $0x10] sm:$0xff] %v1158
    %1175 = vst [vmem:[#allocation11 + $0x18] sm:$0xff] %v1159
    %1176 = vst [vmem:[#allocation11 + $0x20] sm:$0xff] %v1160
    %1177 = vst [vmem:[#allocation11 + $0x28] sm:$0xff] %v1161
    %1178 = vst [vmem:[#allocation11 + $0x30] sm:$0xff] %v1162
    %1179 = vst [vmem:[#allocation11 + $0x38] sm:$0xff] %v1163
    %1180 = vst [vmem:[#allocation11 + $0x40] sm:$0xff] %v1164
    %1181 = vst [vmem:[#allocation11 + $0x48] sm:$0xff] %v1165
    %1182 = vst [vmem:[#allocation11 + $0x50] sm:$0xff] %v1166
    %1183 = vst [vmem:[#allocation11 + $0x58] sm:$0xff] %v1167
    %1184 = vst [vmem:[#allocation11 + $0x60] sm:$0xff] %v1168
    %1185 = vst [vmem:[#allocation11 + $0x68] sm:$0xff] %v1169
    %1186 = vst [vmem:[#allocation11 + $0x70] sm:$0xff] %v1170
    %1187 = vst [vmem:[#allocation11 + $0x78] sm:$0xff] %v1171
    // Predicated region
    $region42: #{tpu_custom_call.1} parent=1 // pred_check
      _
    $region43: #{tpu_custom_call.1} parent=1 // pred_check_branch
      %1189 = sbr.rel (0) target = $region45
    $region44: #{tpu_custom_call.1} parent=1 // pred_region
      %s1191 = ssub.s32 2048, 2048
      %1192 = vsyncadd [#allocation4], %s1191
      %s1193 = sshll.u32 [#allocation11], 4
      %s1194 = int_to_ptr.vmem [resolvable:$true] %s1193
      %1199 = dma.vmem_to_hbm [thread:$0]  %s1194, 2048, %s5, [#allocation4], 128, 128, 8
    $region45: #{tpu_custom_call.1} parent=1 // pred_fallthru
      _
    // Predicated region
    $region46: #{tpu_custom_call.1} parent=1 // pred_check
      _
    $region47: #{tpu_custom_call.1} parent=1 // pred_check_branch
      %1201 = sbr.rel (0) target = $region49
    $region48: #{tpu_custom_call.1} parent=1 // pred_region
      %1202 = dma.done [#allocation4], 2048
    $region49: #{tpu_custom_call.1} parent=1 // pred_fallthru
      _
    %1203 = vsyncpa [#allocation3], 1
    %1204 = vsyncpa [#allocation6], 1
    %1205 = vsyncpa [#allocation9], 1
    %1206 = vsyncpa [#allocation4], 1

</llo_original>
